<compile_context>
chip_gen: v5e
topology: v5e:2x2
jax: 0.10.0
libtpu: 0.0.40
codegen_flags: <defaults>
</compile_context>

<pallas_src>
import functools

import jax
import jax.numpy as jnp
from jax import lax
from jax.experimental import pallas as pl
from jax.experimental.pallas import tpu as pltpu


_VMEM_LIMIT = 32 * 1024 * 1024  # raise to ~64 MiB on v5e/v6e; keep 32 MiB on v7x


# ----------------------------------------------------------------------------
# Tile picking, hardened for the (8,128) BlockSpec divisibility rule.
# ----------------------------------------------------------------------------
def _pick_tile(dim, preferred, multiple):
    """Largest tile <= preferred that divides dim and is a multiple of
    `multiple`.  Falls back to the full axis, which is always legal
    (may cost VMEM for huge non-divisible axes)."""
    if dim <= preferred:
        return dim
    t = (min(preferred, dim) // multiple) * multiple
    while t >= multiple:
        if dim % t == 0:
            return t
        t -= multiple
    return dim


# ----------------------------------------------------------------------------
# Tiled linear:  y = x @ W^T + b      (W kept as (dout, din), no transposes)
# ----------------------------------------------------------------------------
def _linear_kernel(x_ref, w_ref, b_ref, o_ref, acc_ref):
    k = pl.program_id(2)

    @pl.when(k == 0)
    def _():
        acc_ref[...] = jnp.zeros_like(acc_ref)

    acc_ref[...] += lax.dot_general(
        x_ref[...], w_ref[...],
        dimension_numbers=(((1,), (1,)), ((), ())),   # contract din with din
        preferred_element_type=jnp.float32)

    @pl.when(k == pl.num_programs(2) - 1)
    def _():
        o_ref[...] = (acc_ref[...] + b_ref[...]).astype(o_ref.dtype)


def pallas_linear(x, w, b, *, tm=512, tn=512, tk=512):
    """x: (N, din), w: (dout, din), b: (dout,) -> (N, dout)."""
    n, din = x.shape
    dout = w.shape[0]
    tm = _pick_tile(n, tm, 8)        # sublane dim of x / out blocks
    tn = _pick_tile(dout, tn, 128)   # lane dim of out / bias; sublane of w
    tk = _pick_tile(din, tk, 128)    # lane dim of x / w blocks
    grid = (n // tm, dout // tn, din // tk)
    return pl.pallas_call(
        _linear_kernel,
        out_shape=jax.ShapeDtypeStruct((n, dout), x.dtype),
        grid=grid,
        in_specs=[
            pl.BlockSpec((tm, tk), lambda i, j, k: (i, k)),
            pl.BlockSpec((tn, tk), lambda i, j, k: (j, k)),
            pl.BlockSpec((1, tn), lambda i, j, k: (0, j)),
        ],
        out_specs=pl.BlockSpec((tm, tn), lambda i, j, k: (i, j)),
        scratch_shapes=[pltpu.VMEM((tm, tn), jnp.float32)],
        compiler_params=pltpu.CompilerParams(
            dimension_semantics=("parallel", "parallel", "arbitrary"),
            vmem_limit_bytes=_VMEM_LIMIT,
        ),
    )(x, w, b.reshape(1, dout))


# ----------------------------------------------------------------------------
# Reprogramming attention (both small/large branches, all heads) fused with
# the output projection.  One row tile of flattened (B*L) queries per step.
# ----------------------------------------------------------------------------
def _reprog_out_kernel(ab_ref, q_ref, kt_ref, v_ref, wot_ref, bo_ref, o_ref,
                       *, n_heads, d_head):
    # q_ref:  (tr, 2*H*E)      row tile of projected queries (small | large)
    # kt_ref: (2*H*E, S)       K transposed, VMEM-resident
    # v_ref:  (S, 2*H*E)       V, VMEM-resident
    # wot_ref:(H*E, d_llm)     out-projection weight (transposed), resident
    # bo_ref: (1, d_llm)       out-projection bias, resident
    # o_ref:  (tr, d_llm)      lane-dense output tile
    H, E = n_heads, d_head
    dk = H * E
    scale = 1.0 / (float(E) ** 0.5)
    alpha = ab_ref[0]
    beta = ab_ref[1]

    def attn(q, kt, v):
        # q: (tr, E), kt: (E, S), v: (S, E); softmax over S
        s = jnp.dot(q, kt, preferred_element_type=jnp.float32) * scale   # (tr, S)
        m = jnp.max(s, axis=-1, keepdims=True)
        p = jnp.exp(s - m)
        inv = pl.reciprocal(jnp.sum(p, axis=-1, keepdims=True), approx=True)
        return jnp.dot(p, v, preferred_element_type=jnp.float32) * inv   # (tr, E)

    head_outs = []
    for h in range(H):   # static unroll; H is small and known at trace time
        lo = h * E
        out_s = attn(q_ref[:, lo:lo + E],
                     kt_ref[lo:lo + E, :],
                     v_ref[:, lo:lo + E])
        out_l = attn(q_ref[:, dk + lo:dk + lo + E],
                     kt_ref[dk + lo:dk + lo + E, :],
                     v_ref[:, dk + lo:dk + lo + E])
        head_outs.append(alpha * out_s + beta * out_l)

    blended = jnp.concatenate(head_outs, axis=-1)             # (tr, dk)
    y = jnp.dot(blended, wot_ref[...],
                preferred_element_type=jnp.float32) + bo_ref[...]
    o_ref[...] = y.astype(o_ref.dtype)                        # single lane-dense store


def pallas_reprogramming_out(ab, q, kt, v, wot, bo, n_heads, *, row_tile=256):
    """q: (B*L, 2*dk), kt: (2*dk, S), v: (S, 2*dk), wot: (dk, d_llm),
    bo: (1, d_llm), ab: (2,)  ->  (B*L, d_llm)."""
    n_rows, two_dk = q.shape
    dk = two_dk // 2
    S = v.shape[0]
    d_llm = wot.shape[1]
    d_head = dk // n_heads
    tr = _pick_tile(n_rows, row_tile, 8)

    kernel = functools.partial(_reprog_out_kernel, n_heads=n_heads, d_head=d_head)
    return pl.pallas_call(
        kernel,
        out_shape=jax.ShapeDtypeStruct((n_rows, d_llm), q.dtype),
        grid=(n_rows // tr,),
        in_specs=[
            pl.BlockSpec(memory_space=pltpu.MemorySpace.SMEM),   # alpha/beta
            pl.BlockSpec((tr, two_dk), lambda i: (i, 0)),        # Q row tile
            pl.BlockSpec((two_dk, S), lambda i: (0, 0)),         # K^T (resident)
            pl.BlockSpec((S, two_dk), lambda i: (0, 0)),         # V   (resident)
            pl.BlockSpec((dk, d_llm), lambda i: (0, 0)),         # Wo^T (resident)
            pl.BlockSpec((1, d_llm), lambda i: (0, 0)),          # bo   (resident)
        ],
        out_specs=pl.BlockSpec((tr, d_llm), lambda i: (i, 0)),
        compiler_params=pltpu.CompilerParams(
            dimension_semantics=("parallel",),
            vmem_limit_bytes=_VMEM_LIMIT,
        ),
    )(ab, q, kt, v, wot, bo)


# ----------------------------------------------------------------------------
# Parameter init (deterministic, PyTorch nn.Linear-style uniform init)
# ----------------------------------------------------------------------------
def init_params(key, d_model, n_heads, d_llm, d_keys=None):
    d_keys = d_keys or d_model // n_heads
    dk = d_keys * n_heads

    def linear_init(k, dout, din):
        k1, k2 = jax.random.split(k)
        bound = 1.0 / (din ** 0.5)
        w = jax.random.uniform(k1, (dout, din), jnp.float32, -bound, bound)
        b = jax.random.uniform(k2, (dout,), jnp.float32, -bound, bound)
        return w, b

    keys = jax.random.split(key, 7)
    # Note: the base query/key/value_projection layers exist in the PyTorch
    # module but are never used in forward(), so they are not instantiated.
    return {
        "q_small": linear_init(keys[0], dk, d_model),
        "k_small": linear_init(keys[1], dk, d_llm),
        "v_small": linear_init(keys[2], dk, d_llm),
        "q_large": linear_init(keys[3], dk, d_model),
        "k_large": linear_init(keys[4], dk, d_llm),
        "v_large": linear_init(keys[5], dk, d_llm),
        "out": linear_init(keys[6], d_llm, dk),
        "alpha": jnp.float32(0.5),
        "beta": jnp.float32(0.5),
    }


def fuse_params(params):
    """One-time layout plumbing (zero cost at run time):
      * small/large Q/K/V weights concatenated along dout (head-major already),
      * out-projection weight pre-transposed to (dk, d_llm) for the fused
        attention epilogue, bias reshaped to (1, d_llm),
      * alpha/beta stacked for SMEM."""
    def cat(a, b):
        return (jnp.concatenate([a[0], b[0]], axis=0),
                jnp.concatenate([a[1], b[1]], axis=0))
    wo, bo = params["out"]
    return {
        "q": cat(params["q_small"], params["q_large"]),
        "k": cat(params["k_small"], params["k_large"]),
        "v": cat(params["v_small"], params["v_large"]),
        "wot": jnp.transpose(wo),        # (dk, d_llm)
        "bo": bo.reshape(1, -1),         # (1, d_llm)
        "ab": jnp.stack([params["alpha"], params["beta"]]),
    }


# ----------------------------------------------------------------------------
# Forward pass: 3 fused projection matmuls + 1 fused attention/out-proj kernel.
# Only free reshapes + one tiny one-time K transpose in the wrapper.
# ----------------------------------------------------------------------------
def reprogramming_layer_forward(fused_params, target, source, value, n_heads):
    B, L, d_model = target.shape
    S, d_llm = source.shape
    wq, bq = fused_params["q"]
    wk, bk = fused_params["k"]
    wv, bv = fused_params["v"]
    dk = wq.shape[0] // 2

    q = pallas_linear(target.reshape(B * L, d_model), wq, bq)   # (B*L, 2*dk)
    k = pallas_linear(source, wk, bk)                            # (S, 2*dk)
    v = pallas_linear(value, wv, bv)                             # (S, 2*dk)

    # One-time tiny transpose so per-head K slices are sublane slices and the
    # score matmul is lane-dense over S.
    kt = jnp.transpose(k)                                        # (2*dk, S)

    y = pallas_reprogramming_out(fused_params["ab"], q, kt, v,
                                 fused_params["wot"], fused_params["bo"],
                                 n_heads)                        # (B*L, d_llm)
    return y.reshape(B, L, d_llm)


# ----------------------------------------------------------------------------
# Pure-JAX reference (mirrors the PyTorch forward exactly)
# ----------------------------------------------------------------------------
def reference_forward(params, target, source, value, n_heads):
    def lin(x, wb):
        w, b = wb
        return x @ w.T + b

    B, L, _ = target.shape
    S, _ = source.shape
    H = n_heads

    def reprog(q, k, v):
        E = q.shape[-1]
        scores = jnp.einsum("blhe,she->bhls", q, k)
        A = jax.nn.softmax(scores / jnp.sqrt(jnp.float32(E)), axis=-1)
        return jnp.einsum("bhls,she->blhe", A, v)

    q_s = lin(target, params["q_small"]).reshape(B, L, H, -1)
    k_s = lin(source, params["k_small"]).reshape(S, H, -1)
    v_s = lin(value, params["v_small"]).reshape(S, H, -1)
    q_l = lin(target, params["q_large"]).reshape(B, L, H, -1)
    k_l = lin(source, params["k_large"]).reshape(S, H, -1)
    v_l = lin(value, params["v_large"]).reshape(S, H, -1)

    out_s = reprog(q_s, k_s, v_s)
    out_l = reprog(q_l, k_l, v_l)
    out = params["alpha"] * out_s + params["beta"] * out_l
    out = out.reshape(B, L, -1)
    return lin(out, params["out"])


# ----------------------------------------------------------------------------
if __name__ == "__main__":
    B, L, S = 2, 8, 16
    d_model, n_heads, d_llm = 32, 4, 64   # d_keys = 8, dk = H*E = 32

    key = jax.random.PRNGKey(0)
    kp, kt_, ks, kv = jax.random.split(key, 4)

    params = init_params(kp, d_model, n_heads, d_llm)
    fused = fuse_params(params)

    target = jax.random.normal(kt_, (B, L, d_model), jnp.float32)
    source = jax.random.normal(ks, (S, d_llm), jnp.float32)
    value = jax.random.normal(kv, (S, d_llm), jnp.float32)

    fwd = jax.jit(reprogramming_layer_forward, static_argnames=("n_heads",))
    y = jax.block_until_ready(fwd(fused, target, source, value, n_heads=n_heads))

    y_ref = reference_forward(params, target, source, value, n_heads)
    assert y.shape == (B, L, d_llm)
    # tolerance loosened slightly vs f32-exact because of approx reciprocal (EUP)
    assert jnp.allclose(y, y_ref, atol=2e-3, rtol=2e-3), "mismatch vs reference"

    print("KERNEL_OK")
</pallas_src>

<mosaic_0001>
module attributes {stable_mosaic.version = 11 : i64} {
  func.func @_linear_kernel(%arg0: i32, %arg1: i32, %arg2: i32, %arg3: memref<16x32xf32, #tpu.memory_space<vmem>>, %arg4: memref<64x32xf32, #tpu.memory_space<vmem>>, %arg5: memref<1x64xf32, #tpu.memory_space<vmem>>, %arg6: memref<16x64xf32, #tpu.memory_space<vmem>>, %arg7: memref<16x64xf32, #tpu.memory_space<vmem>>) attributes {dimension_semantics = [#tpu.dimension_semantics<parallel>, #tpu.dimension_semantics<parallel>, #tpu.dimension_semantics<arbitrary>], iteration_bounds = array<i64: 1, 1, 1>, scalar_prefetch = 0 : i64, scratch_operands = 1 : i64, tpu.core_type = #tpu.core_type<tc>, window_params = [{transform_indices = @transform_0, window_bounds = array<i64: 16, 32>}, {transform_indices = @transform_1, window_bounds = array<i64: 64, 32>}, {transform_indices = @transform_2, window_bounds = array<i64: 1, 64>}, {transform_indices = @transform_3, window_bounds = array<i64: 16, 64>}]} {
    %c0_i32 = arith.constant 0 : i32
    %0 = arith.cmpi eq, %arg2, %c0_i32 : i32
    %1 = arith.extui %0 : i1 to i32
    %c0_i32_0 = arith.constant 0 : i32
    %2 = arith.cmpi ne, %1, %c0_i32_0 : i32
    scf.if %2 {
      %cst_10 = arith.constant 0.000000e+00 : f32
      %12 = vector.broadcast %cst_10 : f32 to vector<16x64xf32>
      %c0_11 = arith.constant 0 : index
      %c0_12 = arith.constant 0 : index
      %13 = vector.load %arg7[%c0_11, %c0_12] : memref<16x64xf32, #tpu.memory_space<vmem>>, vector<16x64xf32>
      tpu.vector_store %arg7[%c0_11, %c0_12], %12 {strides = array<i32>} : memref<16x64xf32, #tpu.memory_space<vmem>>, vector<16x64xf32>,
    } else {
    }
    %c0 = arith.constant 0 : index
    %c0_1 = arith.constant 0 : index
    %3 = vector.load %arg7[%c0, %c0_1] : memref<16x64xf32, #tpu.memory_space<vmem>>, vector<16x64xf32>
    %c0_2 = arith.constant 0 : index
    %c0_3 = arith.constant 0 : index
    %4 = vector.load %arg3[%c0_2, %c0_3] : memref<16x32xf32, #tpu.memory_space<vmem>>, vector<16x32xf32>
    %c0_4 = arith.constant 0 : index
    %c0_5 = arith.constant 0 : index
    %5 = vector.load %arg4[%c0_4, %c0_5] : memref<64x32xf32, #tpu.memory_space<vmem>>, vector<64x32xf32>
    %cst = arith.constant dense<0.000000e+00> : vector<16x64xf32>
    %6 = tpu.matmul %4, %5, %cst {dimension_numbers = #tpu.dot_dimension_numbers<[1], [1], [0], [0], [0, 0, 1, 0], [], []>} : vector<16x32xf32>, vector<64x32xf32>, vector<16x64xf32> -> vector<16x64xf32>
    %7 = arith.addf %3, %6 : vector<16x64xf32>
    %c0_6 = arith.constant 0 : index
    %c0_7 = arith.constant 0 : index
    %8 = vector.load %arg7[%c0_6, %c0_7] : memref<16x64xf32, #tpu.memory_space<vmem>>, vector<16x64xf32>
    tpu.vector_store %arg7[%c0_6, %c0_7], %7 {strides = array<i32>} : memref<16x64xf32, #tpu.memory_space<vmem>>, vector<16x64xf32>,
    %c0_i32_8 = arith.constant 0 : i32
    %9 = arith.cmpi eq, %arg2, %c0_i32_8 : i32
    %10 = arith.extui %9 : i1 to i32
    %c0_i32_9 = arith.constant 0 : i32
    %11 = arith.cmpi ne, %10, %c0_i32_9 : i32
    scf.if %11 {
      %c0_10 = arith.constant 0 : index
      %c0_11 = arith.constant 0 : index
      %12 = vector.load %arg7[%c0_10, %c0_11] : memref<16x64xf32, #tpu.memory_space<vmem>>, vector<16x64xf32>
      %c0_12 = arith.constant 0 : index
      %c0_13 = arith.constant 0 : index
      %13 = vector.load %arg5[%c0_12, %c0_13] : memref<1x64xf32, #tpu.memory_space<vmem>>, vector<1x64xf32>
      %14 = vector.broadcast %13 : vector<1x64xf32> to vector<16x64xf32>
      %15 = arith.addf %12, %14 : vector<16x64xf32>
      %c0_14 = arith.constant 0 : index
      %c0_15 = arith.constant 0 : index
      %16 = vector.load %arg6[%c0_14, %c0_15] : memref<16x64xf32, #tpu.memory_space<vmem>>, vector<16x64xf32>
      tpu.vector_store %arg6[%c0_14, %c0_15], %15 {strides = array<i32>} : memref<16x64xf32, #tpu.memory_space<vmem>>, vector<16x64xf32>,
    } else {
    }
    return
  }
  func.func @transform_0(%arg0: i32, %arg1: i32, %arg2: i32) -> (i32, i32) {
    %c0_i32 = arith.constant 0 : i32
    return %arg0, %arg2 : i32, i32
  }
  func.func @transform_1(%arg0: i32, %arg1: i32, %arg2: i32) -> (i32, i32) {
    %c0_i32 = arith.constant 0 : i32
    return %arg1, %arg2 : i32, i32
  }
  func.func @transform_2(%arg0: i32, %arg1: i32, %arg2: i32) -> (i32, i32) {
    %c0_i32 = arith.constant 0 : i32
    %c0_i32_0 = arith.constant 0 : i32
    return %c0_i32, %arg1 : i32, i32
  }
  func.func @transform_3(%arg0: i32, %arg1: i32, %arg2: i32) -> (i32, i32) {
    %c0_i32 = arith.constant 0 : i32
    return %arg0, %arg1 : i32, i32
  }
}

module attributes {stable_mosaic.version = 11 : i64} {
  func.func @_linear_kernel(%arg0: i32, %arg1: i32, %arg2: i32, %arg3: memref<16x64xf32, #tpu.memory_space<vmem>>, %arg4: memref<64x64xf32, #tpu.memory_space<vmem>>, %arg5: memref<1x64xf32, #tpu.memory_space<vmem>>, %arg6: memref<16x64xf32, #tpu.memory_space<vmem>>, %arg7: memref<16x64xf32, #tpu.memory_space<vmem>>) attributes {dimension_semantics = [#tpu.dimension_semantics<parallel>, #tpu.dimension_semantics<parallel>, #tpu.dimension_semantics<arbitrary>], iteration_bounds = array<i64: 1, 1, 1>, scalar_prefetch = 0 : i64, scratch_operands = 1 : i64, tpu.core_type = #tpu.core_type<tc>, window_params = [{transform_indices = @transform_0, window_bounds = array<i64: 16, 64>}, {transform_indices = @transform_1, window_bounds = array<i64: 64, 64>}, {transform_indices = @transform_2, window_bounds = array<i64: 1, 64>}, {transform_indices = @transform_3, window_bounds = array<i64: 16, 64>}]} {
    %c0_i32 = arith.constant 0 : i32
    %0 = arith.cmpi eq, %arg2, %c0_i32 : i32
    %1 = arith.extui %0 : i1 to i32
    %c0_i32_0 = arith.constant 0 : i32
    %2 = arith.cmpi ne, %1, %c0_i32_0 : i32
    scf.if %2 {
      %cst_10 = arith.constant 0.000000e+00 : f32
      %12 = vector.broadcast %cst_10 : f32 to vector<16x64xf32>
      %c0_11 = arith.constant 0 : index
      %c0_12 = arith.constant 0 : index
      %13 = vector.load %arg7[%c0_11, %c0_12] : memref<16x64xf32, #tpu.memory_space<vmem>>, vector<16x64xf32>
      tpu.vector_store %arg7[%c0_11, %c0_12], %12 {strides = array<i32>} : memref<16x64xf32, #tpu.memory_space<vmem>>, vector<16x64xf32>,
    } else {
    }
    %c0 = arith.constant 0 : index
    %c0_1 = arith.constant 0 : index
    %3 = vector.load %arg7[%c0, %c0_1] : memref<16x64xf32, #tpu.memory_space<vmem>>, vector<16x64xf32>
    %c0_2 = arith.constant 0 : index
    %c0_3 = arith.constant 0 : index
    %4 = vector.load %arg3[%c0_2, %c0_3] : memref<16x64xf32, #tpu.memory_space<vmem>>, vector<16x64xf32>
    %c0_4 = arith.constant 0 : index
    %c0_5 = arith.constant 0 : index
    %5 = vector.load %arg4[%c0_4, %c0_5] : memref<64x64xf32, #tpu.memory_space<vmem>>, vector<64x64xf32>
    %cst = arith.constant dense<0.000000e+00> : vector<16x64xf32>
    %6 = tpu.matmul %4, %5, %cst {dimension_numbers = #tpu.dot_dimension_numbers<[1], [1], [0], [0], [0, 0, 1, 0], [], []>} : vector<16x64xf32>, vector<64x64xf32>, vector<16x64xf32> -> vector<16x64xf32>
    %7 = arith.addf %3, %6 : vector<16x64xf32>
    %c0_6 = arith.constant 0 : index
    %c0_7 = arith.constant 0 : index
    %8 = vector.load %arg7[%c0_6, %c0_7] : memref<16x64xf32, #tpu.memory_space<vmem>>, vector<16x64xf32>
    tpu.vector_store %arg7[%c0_6, %c0_7], %7 {strides = array<i32>} : memref<16x64xf32, #tpu.memory_space<vmem>>, vector<16x64xf32>,
    %c0_i32_8 = arith.constant 0 : i32
    %9 = arith.cmpi eq, %arg2, %c0_i32_8 : i32
    %10 = arith.extui %9 : i1 to i32
    %c0_i32_9 = arith.constant 0 : i32
    %11 = arith.cmpi ne, %10, %c0_i32_9 : i32
    scf.if %11 {
      %c0_10 = arith.constant 0 : index
      %c0_11 = arith.constant 0 : index
      %12 = vector.load %arg7[%c0_10, %c0_11] : memref<16x64xf32, #tpu.memory_space<vmem>>, vector<16x64xf32>
      %c0_12 = arith.constant 0 : index
      %c0_13 = arith.constant 0 : index
      %13 = vector.load %arg5[%c0_12, %c0_13] : memref<1x64xf32, #tpu.memory_space<vmem>>, vector<1x64xf32>
      %14 = vector.broadcast %13 : vector<1x64xf32> to vector<16x64xf32>
      %15 = arith.addf %12, %14 : vector<16x64xf32>
      %c0_14 = arith.constant 0 : index
      %c0_15 = arith.constant 0 : index
      %16 = vector.load %arg6[%c0_14, %c0_15] : memref<16x64xf32, #tpu.memory_space<vmem>>, vector<16x64xf32>
      tpu.vector_store %arg6[%c0_14, %c0_15], %15 {strides = array<i32>} : memref<16x64xf32, #tpu.memory_space<vmem>>, vector<16x64xf32>,
    } else {
    }
    return
  }
  func.func @transform_0(%arg0: i32, %arg1: i32, %arg2: i32) -> (i32, i32) {
    %c0_i32 = arith.constant 0 : i32
    return %arg0, %arg2 : i32, i32
  }
  func.func @transform_1(%arg0: i32, %arg1: i32, %arg2: i32) -> (i32, i32) {
    %c0_i32 = arith.constant 0 : i32
    return %arg1, %arg2 : i32, i32
  }
  func.func @transform_2(%arg0: i32, %arg1: i32, %arg2: i32) -> (i32, i32) {
    %c0_i32 = arith.constant 0 : i32
    %c0_i32_0 = arith.constant 0 : i32
    return %c0_i32, %arg1 : i32, i32
  }
  func.func @transform_3(%arg0: i32, %arg1: i32, %arg2: i32) -> (i32, i32) {
    %c0_i32 = arith.constant 0 : i32
    return %arg0, %arg1 : i32, i32
  }
}

module attributes {stable_mosaic.version = 11 : i64} {
  func.func @_reprog_out_kernel(%arg0: i32, %arg1: memref<2xf32, #tpu.memory_space<smem>>, %arg2: memref<16x64xf32, #tpu.memory_space<vmem>>, %arg3: memref<64x16xf32, #tpu.memory_space<vmem>>, %arg4: memref<16x64xf32, #tpu.memory_space<vmem>>, %arg5: memref<32x64xf32, #tpu.memory_space<vmem>>, %arg6: memref<1x64xf32, #tpu.memory_space<vmem>>, %arg7: memref<16x64xf32, #tpu.memory_space<vmem>>) attributes {dimension_semantics = [#tpu.dimension_semantics<parallel>], iteration_bounds = array<i64: 1>, scalar_prefetch = 0 : i64, scratch_operands = 0 : i64, tpu.core_type = #tpu.core_type<tc>, window_params = [{transform_indices = @transform_0, window_bounds = array<i64: 2>}, {transform_indices = @transform_1, window_bounds = array<i64: 16, 64>}, {pipeline_mode = #tpu.pipeline_mode<synchronous>, transform_indices = @transform_2, window_bounds = array<i64: 64, 16>}, {pipeline_mode = #tpu.pipeline_mode<synchronous>, transform_indices = @transform_3, window_bounds = array<i64: 16, 64>}, {pipeline_mode = #tpu.pipeline_mode<synchronous>, transform_indices = @transform_4, window_bounds = array<i64: 32, 64>}, {pipeline_mode = #tpu.pipeline_mode<synchronous>, transform_indices = @transform_5, window_bounds = array<i64: 1, 64>}, {transform_indices = @transform_6, window_bounds = array<i64: 16, 64>}]} {
    %c0 = arith.constant 0 : index
    %0 = memref.load %arg1[%c0] : memref<2xf32, #tpu.memory_space<smem>>
    %c1 = arith.constant 1 : index
    %1 = memref.load %arg1[%c1] : memref<2xf32, #tpu.memory_space<smem>>
    %c0_0 = arith.constant 0 : index
    %c0_1 = arith.constant 0 : index
    %2 = vector.load %arg2[%c0_0, %c0_1] : memref<16x64xf32, #tpu.memory_space<vmem>>, vector<16x8xf32>
    %c0_2 = arith.constant 0 : index
    %c0_3 = arith.constant 0 : index
    %3 = vector.load %arg3[%c0_2, %c0_3] : memref<64x16xf32, #tpu.memory_space<vmem>>, vector<8x16xf32>
    %c0_4 = arith.constant 0 : index
    %c0_5 = arith.constant 0 : index
    %4 = vector.load %arg4[%c0_4, %c0_5] : memref<16x64xf32, #tpu.memory_space<vmem>>, vector<16x8xf32>
    %cst = arith.constant dense<0.000000e+00> : vector<16x16xf32>
    %5 = tpu.matmul %2, %3, %cst {dimension_numbers = #tpu.dot_dimension_numbers<[1], [0], [0], [1], [0, 0, 1, 1], [], []>} : vector<16x8xf32>, vector<8x16xf32>, vector<16x16xf32> -> vector<16x16xf32>
    %cst_6 = arith.constant 0.353553385 : f32
    %6 = vector.broadcast %cst_6 : f32 to vector<16x16xf32>
    %7 = arith.mulf %5, %6 : vector<16x16xf32>
    %cst_7 = arith.constant dense<0xFF800000> : vector<16xf32>
    %8 = vector.multi_reduction <maximumf>, %7, %cst_7 [1] : vector<16x16xf32> to vector<16xf32>
    %9 = vector.shape_cast %8 : vector<16xf32> to vector<16x1xf32>
    %10 = vector.broadcast %9 : vector<16x1xf32> to vector<16x16xf32>
    %11 = arith.subf %7, %10 : vector<16x16xf32>
    %12 = math.exp %11 : vector<16x16xf32>
    %cst_8 = arith.constant dense<0.000000e+00> : vector<16xf32>
    %13 = vector.multi_reduction <add>, %12, %cst_8 [1] : vector<16x16xf32> to vector<16xf32>
    %14 = vector.shape_cast %13 : vector<16xf32> to vector<16x1xf32>
    %15 = tpu.reciprocal %14 {approx = true} : vector<16x1xf32> -> vector<16x1xf32>
    %cst_9 = arith.constant dense<0.000000e+00> : vector<16x8xf32>
    %16 = tpu.matmul %12, %4, %cst_9 {dimension_numbers = #tpu.dot_dimension_numbers<[1], [0], [0], [1], [0, 0, 1, 1], [], []>} : vector<16x16xf32>, vector<16x8xf32>, vector<16x8xf32> -> vector<16x8xf32>
    %17 = vector.broadcast %15 : vector<16x1xf32> to vector<16x8xf32>
    %18 = arith.mulf %16, %17 : vector<16x8xf32>
    %c0_10 = arith.constant 0 : index
    %c32 = arith.constant 32 : index
    %19 = vector.load %arg2[%c0_10, %c32] : memref<16x64xf32, #tpu.memory_space<vmem>>, vector<16x8xf32>
    %c32_11 = arith.constant 32 : index
    %c0_12 = arith.constant 0 : index
    %20 = vector.load %arg3[%c32_11, %c0_12] : memref<64x16xf32, #tpu.memory_space<vmem>>, vector<8x16xf32>
    %c0_13 = arith.constant 0 : index
    %c32_14 = arith.constant 32 : index
    %21 = vector.load %arg4[%c0_13, %c32_14] : memref<16x64xf32, #tpu.memory_space<vmem>>, vector<16x8xf32>
    %cst_15 = arith.constant dense<0.000000e+00> : vector<16x16xf32>
    %22 = tpu.matmul %19, %20, %cst_15 {dimension_numbers = #tpu.dot_dimension_numbers<[1], [0], [0], [1], [0, 0, 1, 1], [], []>} : vector<16x8xf32>, vector<8x16xf32>, vector<16x16xf32> -> vector<16x16xf32>
    %cst_16 = arith.constant 0.353553385 : f32
    %23 = vector.broadcast %cst_16 : f32 to vector<16x16xf32>
    %24 = arith.mulf %22, %23 : vector<16x16xf32>
    %cst_17 = arith.constant dense<0xFF800000> : vector<16xf32>
    %25 = vector.multi_reduction <maximumf>, %24, %cst_17 [1] : vector<16x16xf32> to vector<16xf32>
    %26 = vector.shape_cast %25 : vector<16xf32> to vector<16x1xf32>
    %27 = vector.broadcast %26 : vector<16x1xf32> to vector<16x16xf32>
    %28 = arith.subf %24, %27 : vector<16x16xf32>
    %29 = math.exp %28 : vector<16x16xf32>
    %cst_18 = arith.constant dense<0.000000e+00> : vector<16xf32>
    %30 = vector.multi_reduction <add>, %29, %cst_18 [1] : vector<16x16xf32> to vector<16xf32>
    %31 = vector.shape_cast %30 : vector<16xf32> to vector<16x1xf32>
    %32 = tpu.reciprocal %31 {approx = true} : vector<16x1xf32> -> vector<16x1xf32>
    %cst_19 = arith.constant dense<0.000000e+00> : vector<16x8xf32>
    %33 = tpu.matmul %29, %21, %cst_19 {dimension_numbers = #tpu.dot_dimension_numbers<[1], [0], [0], [1], [0, 0, 1, 1], [], []>} : vector<16x16xf32>, vector<16x8xf32>, vector<16x8xf32> -> vector<16x8xf32>
    %34 = vector.broadcast %32 : vector<16x1xf32> to vector<16x8xf32>
    %35 = arith.mulf %33, %34 : vector<16x8xf32>
    %36 = vector.broadcast %0 : f32 to vector<16x8xf32>
    %37 = arith.mulf %36, %18 : vector<16x8xf32>
    %38 = vector.broadcast %1 : f32 to vector<16x8xf32>
    %39 = arith.mulf %38, %35 : vector<16x8xf32>
    %40 = arith.addf %37, %39 : vector<16x8xf32>
    %c0_20 = arith.constant 0 : index
    %c8 = arith.constant 8 : index
    %41 = vector.load %arg2[%c0_20, %c8] : memref<16x64xf32, #tpu.memory_space<vmem>>, vector<16x8xf32>
    %c8_21 = arith.constant 8 : index
    %c0_22 = arith.constant 0 : index
    %42 = vector.load %arg3[%c8_21, %c0_22] : memref<64x16xf32, #tpu.memory_space<vmem>>, vector<8x16xf32>
    %c0_23 = arith.constant 0 : index
    %c8_24 = arith.constant 8 : index
    %43 = vector.load %arg4[%c0_23, %c8_24] : memref<16x64xf32, #tpu.memory_space<vmem>>, vector<16x8xf32>
    %cst_25 = arith.constant dense<0.000000e+00> : vector<16x16xf32>
    %44 = tpu.matmul %41, %42, %cst_25 {dimension_numbers = #tpu.dot_dimension_numbers<[1], [0], [0], [1], [0, 0, 1, 1], [], []>} : vector<16x8xf32>, vector<8x16xf32>, vector<16x16xf32> -> vector<16x16xf32>
    %cst_26 = arith.constant 0.353553385 : f32
    %45 = vector.broadcast %cst_26 : f32 to vector<16x16xf32>
    %46 = arith.mulf %44, %45 : vector<16x16xf32>
    %cst_27 = arith.constant dense<0xFF800000> : vector<16xf32>
    %47 = vector.multi_reduction <maximumf>, %46, %cst_27 [1] : vector<16x16xf32> to vector<16xf32>
    %48 = vector.shape_cast %47 : vector<16xf32> to vector<16x1xf32>
    %49 = vector.broadcast %48 : vector<16x1xf32> to vector<16x16xf32>
    %50 = arith.subf %46, %49 : vector<16x16xf32>
    %51 = math.exp %50 : vector<16x16xf32>
    %cst_28 = arith.constant dense<0.000000e+00> : vector<16xf32>
    %52 = vector.multi_reduction <add>, %51, %cst_28 [1] : vector<16x16xf32> to vector<16xf32>
    %53 = vector.shape_cast %52 : vector<16xf32> to vector<16x1xf32>
    %54 = tpu.reciprocal %53 {approx = true} : vector<16x1xf32> -> vector<16x1xf32>
    %cst_29 = arith.constant dense<0.000000e+00> : vector<16x8xf32>
    %55 = tpu.matmul %51, %43, %cst_29 {dimension_numbers = #tpu.dot_dimension_numbers<[1], [0], [0], [1], [0, 0, 1, 1], [], []>} : vector<16x16xf32>, vector<16x8xf32>, vector<16x8xf32> -> vector<16x8xf32>
    %56 = vector.broadcast %54 : vector<16x1xf32> to vector<16x8xf32>
    %57 = arith.mulf %55, %56 : vector<16x8xf32>
    %c0_30 = arith.constant 0 : index
    %c40 = arith.constant 40 : index
    %58 = vector.load %arg2[%c0_30, %c40] : memref<16x64xf32, #tpu.memory_space<vmem>>, vector<16x8xf32>
    %c40_31 = arith.constant 40 : index
    %c0_32 = arith.constant 0 : index
    %59 = vector.load %arg3[%c40_31, %c0_32] : memref<64x16xf32, #tpu.memory_space<vmem>>, vector<8x16xf32>
    %c0_33 = arith.constant 0 : index
    %c40_34 = arith.constant 40 : index
    %60 = vector.load %arg4[%c0_33, %c40_34] : memref<16x64xf32, #tpu.memory_space<vmem>>, vector<16x8xf32>
    %cst_35 = arith.constant dense<0.000000e+00> : vector<16x16xf32>
    %61 = tpu.matmul %58, %59, %cst_35 {dimension_numbers = #tpu.dot_dimension_numbers<[1], [0], [0], [1], [0, 0, 1, 1], [], []>} : vector<16x8xf32>, vector<8x16xf32>, vector<16x16xf32> -> vector<16x16xf32>
    %cst_36 = arith.constant 0.353553385 : f32
    %62 = vector.broadcast %cst_36 : f32 to vector<16x16xf32>
    %63 = arith.mulf %61, %62 : vector<16x16xf32>
    %cst_37 = arith.constant dense<0xFF800000> : vector<16xf32>
    %64 = vector.multi_reduction <maximumf>, %63, %cst_37 [1] : vector<16x16xf32> to vector<16xf32>
    %65 = vector.shape_cast %64 : vector<16xf32> to vector<16x1xf32>
    %66 = vector.broadcast %65 : vector<16x1xf32> to vector<16x16xf32>
    %67 = arith.subf %63, %66 : vector<16x16xf32>
    %68 = math.exp %67 : vector<16x16xf32>
    %cst_38 = arith.constant dense<0.000000e+00> : vector<16xf32>
    %69 = vector.multi_reduction <add>, %68, %cst_38 [1] : vector<16x16xf32> to vector<16xf32>
    %70 = vector.shape_cast %69 : vector<16xf32> to vector<16x1xf32>
    %71 = tpu.reciprocal %70 {approx = true} : vector<16x1xf32> -> vector<16x1xf32>
    %cst_39 = arith.constant dense<0.000000e+00> : vector<16x8xf32>
    %72 = tpu.matmul %68, %60, %cst_39 {dimension_numbers = #tpu.dot_dimension_numbers<[1], [0], [0], [1], [0, 0, 1, 1], [], []>} : vector<16x16xf32>, vector<16x8xf32>, vector<16x8xf32> -> vector<16x8xf32>
    %73 = vector.broadcast %71 : vector<16x1xf32> to vector<16x8xf32>
    %74 = arith.mulf %72, %73 : vector<16x8xf32>
    %75 = vector.broadcast %0 : f32 to vector<16x8xf32>
    %76 = arith.mulf %75, %57 : vector<16x8xf32>
    %77 = vector.broadcast %1 : f32 to vector<16x8xf32>
    %78 = arith.mulf %77, %74 : vector<16x8xf32>
    %79 = arith.addf %76, %78 : vector<16x8xf32>
    %c0_40 = arith.constant 0 : index
    %c16 = arith.constant 16 : index
    %80 = vector.load %arg2[%c0_40, %c16] : memref<16x64xf32, #tpu.memory_space<vmem>>, vector<16x8xf32>
    %c16_41 = arith.constant 16 : index
    %c0_42 = arith.constant 0 : index
    %81 = vector.load %arg3[%c16_41, %c0_42] : memref<64x16xf32, #tpu.memory_space<vmem>>, vector<8x16xf32>
    %c0_43 = arith.constant 0 : index
    %c16_44 = arith.constant 16 : index
    %82 = vector.load %arg4[%c0_43, %c16_44] : memref<16x64xf32, #tpu.memory_space<vmem>>, vector<16x8xf32>
    %cst_45 = arith.constant dense<0.000000e+00> : vector<16x16xf32>
    %83 = tpu.matmul %80, %81, %cst_45 {dimension_numbers = #tpu.dot_dimension_numbers<[1], [0], [0], [1], [0, 0, 1, 1], [], []>} : vector<16x8xf32>, vector<8x16xf32>, vector<16x16xf32> -> vector<16x16xf32>
    %cst_46 = arith.constant 0.353553385 : f32
    %84 = vector.broadcast %cst_46 : f32 to vector<16x16xf32>
    %85 = arith.mulf %83, %84 : vector<16x16xf32>
    %cst_47 = arith.constant dense<0xFF800000> : vector<16xf32>
    %86 = vector.multi_reduction <maximumf>, %85, %cst_47 [1] : vector<16x16xf32> to vector<16xf32>
    %87 = vector.shape_cast %86 : vector<16xf32> to vector<16x1xf32>
    %88 = vector.broadcast %87 : vector<16x1xf32> to vector<16x16xf32>
    %89 = arith.subf %85, %88 : vector<16x16xf32>
    %90 = math.exp %89 : vector<16x16xf32>
    %cst_48 = arith.constant dense<0.000000e+00> : vector<16xf32>
    %91 = vector.multi_reduction <add>, %90, %cst_48 [1] : vector<16x16xf32> to vector<16xf32>
    %92 = vector.shape_cast %91 : vector<16xf32> to vector<16x1xf32>
    %93 = tpu.reciprocal %92 {approx = true} : vector<16x1xf32> -> vector<16x1xf32>
    %cst_49 = arith.constant dense<0.000000e+00> : vector<16x8xf32>
    %94 = tpu.matmul %90, %82, %cst_49 {dimension_numbers = #tpu.dot_dimension_numbers<[1], [0], [0], [1], [0, 0, 1, 1], [], []>} : vector<16x16xf32>, vector<16x8xf32>, vector<16x8xf32> -> vector<16x8xf32>
    %95 = vector.broadcast %93 : vector<16x1xf32> to vector<16x8xf32>
    %96 = arith.mulf %94, %95 : vector<16x8xf32>
    %c0_50 = arith.constant 0 : index
    %c48 = arith.constant 48 : index
    %97 = vector.load %arg2[%c0_50, %c48] : memref<16x64xf32, #tpu.memory_space<vmem>>, vector<16x8xf32>
    %c48_51 = arith.constant 48 : index
    %c0_52 = arith.constant 0 : index
    %98 = vector.load %arg3[%c48_51, %c0_52] : memref<64x16xf32, #tpu.memory_space<vmem>>, vector<8x16xf32>
    %c0_53 = arith.constant 0 : index
    %c48_54 = arith.constant 48 : index
    %99 = vector.load %arg4[%c0_53, %c48_54] : memref<16x64xf32, #tpu.memory_space<vmem>>, vector<16x8xf32>
    %cst_55 = arith.constant dense<0.000000e+00> : vector<16x16xf32>
    %100 = tpu.matmul %97, %98, %cst_55 {dimension_numbers = #tpu.dot_dimension_numbers<[1], [0], [0], [1], [0, 0, 1, 1], [], []>} : vector<16x8xf32>, vector<8x16xf32>, vector<16x16xf32> -> vector<16x16xf32>
    %cst_56 = arith.constant 0.353553385 : f32
    %101 = vector.broadcast %cst_56 : f32 to vector<16x16xf32>
    %102 = arith.mulf %100, %101 : vector<16x16xf32>
    %cst_57 = arith.constant dense<0xFF800000> : vector<16xf32>
    %103 = vector.multi_reduction <maximumf>, %102, %cst_57 [1] : vector<16x16xf32> to vector<16xf32>
    %104 = vector.shape_cast %103 : vector<16xf32> to vector<16x1xf32>
    %105 = vector.broadcast %104 : vector<16x1xf32> to vector<16x16xf32>
    %106 = arith.subf %102, %105 : vector<16x16xf32>
    %107 = math.exp %106 : vector<16x16xf32>
    %cst_58 = arith.constant dense<0.000000e+00> : vector<16xf32>
    %108 = vector.multi_reduction <add>, %107, %cst_58 [1] : vector<16x16xf32> to vector<16xf32>
    %109 = vector.shape_cast %108 : vector<16xf32> to vector<16x1xf32>
    %110 = tpu.reciprocal %109 {approx = true} : vector<16x1xf32> -> vector<16x1xf32>
    %cst_59 = arith.constant dense<0.000000e+00> : vector<16x8xf32>
    %111 = tpu.matmul %107, %99, %cst_59 {dimension_numbers = #tpu.dot_dimension_numbers<[1], [0], [0], [1], [0, 0, 1, 1], [], []>} : vector<16x16xf32>, vector<16x8xf32>, vector<16x8xf32> -> vector<16x8xf32>
    %112 = vector.broadcast %110 : vector<16x1xf32> to vector<16x8xf32>
    %113 = arith.mulf %111, %112 : vector<16x8xf32>
    %114 = vector.broadcast %0 : f32 to vector<16x8xf32>
    %115 = arith.mulf %114, %96 : vector<16x8xf32>
    %116 = vector.broadcast %1 : f32 to vector<16x8xf32>
    %117 = arith.mulf %116, %113 : vector<16x8xf32>
    %118 = arith.addf %115, %117 : vector<16x8xf32>
    %c0_60 = arith.constant 0 : index
    %c24 = arith.constant 24 : index
    %119 = vector.load %arg2[%c0_60, %c24] : memref<16x64xf32, #tpu.memory_space<vmem>>, vector<16x8xf32>
    %c24_61 = arith.constant 24 : index
    %c0_62 = arith.constant 0 : index
    %120 = vector.load %arg3[%c24_61, %c0_62] : memref<64x16xf32, #tpu.memory_space<vmem>>, vector<8x16xf32>
    %c0_63 = arith.constant 0 : index
    %c24_64 = arith.constant 24 : index
    %121 = vector.load %arg4[%c0_63, %c24_64] : memref<16x64xf32, #tpu.memory_space<vmem>>, vector<16x8xf32>
    %cst_65 = arith.constant dense<0.000000e+00> : vector<16x16xf32>
    %122 = tpu.matmul %119, %120, %cst_65 {dimension_numbers = #tpu.dot_dimension_numbers<[1], [0], [0], [1], [0, 0, 1, 1], [], []>} : vector<16x8xf32>, vector<8x16xf32>, vector<16x16xf32> -> vector<16x16xf32>
    %cst_66 = arith.constant 0.353553385 : f32
    %123 = vector.broadcast %cst_66 : f32 to vector<16x16xf32>
    %124 = arith.mulf %122, %123 : vector<16x16xf32>
    %cst_67 = arith.constant dense<0xFF800000> : vector<16xf32>
    %125 = vector.multi_reduction <maximumf>, %124, %cst_67 [1] : vector<16x16xf32> to vector<16xf32>
    %126 = vector.shape_cast %125 : vector<16xf32> to vector<16x1xf32>
    %127 = vector.broadcast %126 : vector<16x1xf32> to vector<16x16xf32>
    %128 = arith.subf %124, %127 : vector<16x16xf32>
    %129 = math.exp %128 : vector<16x16xf32>
    %cst_68 = arith.constant dense<0.000000e+00> : vector<16xf32>
    %130 = vector.multi_reduction <add>, %129, %cst_68 [1] : vector<16x16xf32> to vector<16xf32>
    %131 = vector.shape_cast %130 : vector<16xf32> to vector<16x1xf32>
    %132 = tpu.reciprocal %131 {approx = true} : vector<16x1xf32> -> vector<16x1xf32>
    %cst_69 = arith.constant dense<0.000000e+00> : vector<16x8xf32>
    %133 = tpu.matmul %129, %121, %cst_69 {dimension_numbers = #tpu.dot_dimension_numbers<[1], [0], [0], [1], [0, 0, 1, 1], [], []>} : vector<16x16xf32>, vector<16x8xf32>, vector<16x8xf32> -> vector<16x8xf32>
    %134 = vector.broadcast %132 : vector<16x1xf32> to vector<16x8xf32>
    %135 = arith.mulf %133, %134 : vector<16x8xf32>
    %c0_70 = arith.constant 0 : index
    %c56 = arith.constant 56 : index
    %136 = vector.load %arg2[%c0_70, %c56] : memref<16x64xf32, #tpu.memory_space<vmem>>, vector<16x8xf32>
    %c56_71 = arith.constant 56 : index
    %c0_72 = arith.constant 0 : index
    %137 = vector.load %arg3[%c56_71, %c0_72] : memref<64x16xf32, #tpu.memory_space<vmem>>, vector<8x16xf32>
    %c0_73 = arith.constant 0 : index
    %c56_74 = arith.constant 56 : index
    %138 = vector.load %arg4[%c0_73, %c56_74] : memref<16x64xf32, #tpu.memory_space<vmem>>, vector<16x8xf32>
    %cst_75 = arith.constant dense<0.000000e+00> : vector<16x16xf32>
    %139 = tpu.matmul %136, %137, %cst_75 {dimension_numbers = #tpu.dot_dimension_numbers<[1], [0], [0], [1], [0, 0, 1, 1], [], []>} : vector<16x8xf32>, vector<8x16xf32>, vector<16x16xf32> -> vector<16x16xf32>
    %cst_76 = arith.constant 0.353553385 : f32
    %140 = vector.broadcast %cst_76 : f32 to vector<16x16xf32>
    %141 = arith.mulf %139, %140 : vector<16x16xf32>
    %cst_77 = arith.constant dense<0xFF800000> : vector<16xf32>
    %142 = vector.multi_reduction <maximumf>, %141, %cst_77 [1] : vector<16x16xf32> to vector<16xf32>
    %143 = vector.shape_cast %142 : vector<16xf32> to vector<16x1xf32>
    %144 = vector.broadcast %143 : vector<16x1xf32> to vector<16x16xf32>
    %145 = arith.subf %141, %144 : vector<16x16xf32>
    %146 = math.exp %145 : vector<16x16xf32>
    %cst_78 = arith.constant dense<0.000000e+00> : vector<16xf32>
    %147 = vector.multi_reduction <add>, %146, %cst_78 [1] : vector<16x16xf32> to vector<16xf32>
    %148 = vector.shape_cast %147 : vector<16xf32> to vector<16x1xf32>
    %149 = tpu.reciprocal %148 {approx = true} : vector<16x1xf32> -> vector<16x1xf32>
    %cst_79 = arith.constant dense<0.000000e+00> : vector<16x8xf32>
    %150 = tpu.matmul %146, %138, %cst_79 {dimension_numbers = #tpu.dot_dimension_numbers<[1], [0], [0], [1], [0, 0, 1, 1], [], []>} : vector<16x16xf32>, vector<16x8xf32>, vector<16x8xf32> -> vector<16x8xf32>
    %151 = vector.broadcast %149 : vector<16x1xf32> to vector<16x8xf32>
    %152 = arith.mulf %150, %151 : vector<16x8xf32>
    %153 = vector.broadcast %0 : f32 to vector<16x8xf32>
    %154 = arith.mulf %153, %135 : vector<16x8xf32>
    %155 = vector.broadcast %1 : f32 to vector<16x8xf32>
    %156 = arith.mulf %155, %152 : vector<16x8xf32>
    %157 = arith.addf %154, %156 : vector<16x8xf32>
    %158 = tpu.concatenate %40, %79, %118, %157 in 1 : vector<16x8xf32>, vector<16x8xf32>, vector<16x8xf32>, vector<16x8xf32> -> vector<16x32xf32>
    %c0_80 = arith.constant 0 : index
    %c0_81 = arith.constant 0 : index
    %159 = vector.load %arg5[%c0_80, %c0_81] : memref<32x64xf32, #tpu.memory_space<vmem>>, vector<32x64xf32>
    %cst_82 = arith.constant dense<0.000000e+00> : vector<16x64xf32>
    %160 = tpu.matmul %158, %159, %cst_82 {dimension_numbers = #tpu.dot_dimension_numbers<[1], [0], [0], [1], [0, 0, 1, 1], [], []>} : vector<16x32xf32>, vector<32x64xf32>, vector<16x64xf32> -> vector<16x64xf32>
    %c0_83 = arith.constant 0 : index
    %c0_84 = arith.constant 0 : index
    %161 = vector.load %arg6[%c0_83, %c0_84] : memref<1x64xf32, #tpu.memory_space<vmem>>, vector<1x64xf32>
    %162 = vector.broadcast %161 : vector<1x64xf32> to vector<16x64xf32>
    %163 = arith.addf %160, %162 : vector<16x64xf32>
    %c0_85 = arith.constant 0 : index
    %c0_86 = arith.constant 0 : index
    %164 = vector.load %arg7[%c0_85, %c0_86] : memref<16x64xf32, #tpu.memory_space<vmem>>, vector<16x64xf32>
    tpu.vector_store %arg7[%c0_85, %c0_86], %163 {strides = array<i32>} : memref<16x64xf32, #tpu.memory_space<vmem>>, vector<16x64xf32>,
    return
  }
  func.func @transform_0(%arg0: i32) -> i32 {
    %c0_i32 = arith.constant 0 : i32
    %c0_i32_0 = arith.constant 0 : i32
    return %c0_i32 : i32
  }
  func.func @transform_1(%arg0: i32) -> (i32, i32) {
    %c0_i32 = arith.constant 0 : i32
    %c0_i32_0 = arith.constant 0 : i32
    return %arg0, %c0_i32 : i32, i32
  }
  func.func @transform_2(%arg0: i32) -> (i32, i32) {
    %c0_i32 = arith.constant 0 : i32
    %c0_i32_0 = arith.constant 0 : i32
    %c0_i32_1 = arith.constant 0 : i32
    return %c0_i32, %c0_i32_0 : i32, i32
  }
  func.func @transform_3(%arg0: i32) -> (i32, i32) {
    %c0_i32 = arith.constant 0 : i32
    %c0_i32_0 = arith.constant 0 : i32
    %c0_i32_1 = arith.constant 0 : i32
    return %c0_i32, %c0_i32_0 : i32, i32
  }
  func.func @transform_4(%arg0: i32) -> (i32, i32) {
    %c0_i32 = arith.constant 0 : i32
    %c0_i32_0 = arith.constant 0 : i32
    %c0_i32_1 = arith.constant 0 : i32
    return %c0_i32, %c0_i32_0 : i32, i32
  }
  func.func @transform_5(%arg0: i32) -> (i32, i32) {
    %c0_i32 = arith.constant 0 : i32
    %c0_i32_0 = arith.constant 0 : i32
    %c0_i32_1 = arith.constant 0 : i32
    return %c0_i32, %c0_i32_0 : i32, i32
  }
  func.func @transform_6(%arg0: i32) -> (i32, i32) {
    %c0_i32 = arith.constant 0 : i32
    %c0_i32_0 = arith.constant 0 : i32
    return %arg0, %c0_i32 : i32, i32
  }
}

</mosaic_0001>

<llo_original>
// kernel: reprogramming_layer_forward.4
$region0: #{reprogramming_layer_forward.4}
  #allocation0 [shape = 'u32[]', space=smem, size = 0x4, offset = 0x4, fixed_abs, tag = 'smem constant byte address 0x4 - core index']
  #allocation1 [shape = 'u32[72,128]{1,0:T(1,128)}', space=vmem, size = 0x9000, scoped, tag = 'internal scratch']
  #allocation2 [shape = 'f32[16,64]{1,0:T(8,128)}', space=vmem, size = 0x2000, scoped, tag = 'scratch operand']
  %s0 = inlined_call_operand.vmem [shape: f32[16,32], index: 0, kind: input, shape index: {}]
  %s1 = inlined_call_operand.vmem [shape: f32[64,32], index: 1, kind: input, shape index: {}]
  %s2 = inlined_call_operand.vmem [shape: f32[1,64], index: 2, kind: input, shape index: {}]
  %s3 = inlined_call_operand.vmem [shape: f32[16,64], index: 3, kind: output, shape index: {}]
  %s4 = sld [smem:[#allocation0]]
  $region30: #{reprogramming_layer_forward.4} parent=0
    _
  %s6 = ssub.s32 1, %s4
  %s7 = scalar_select 0, %s6, %s4
  // Predicated region
  $region2: #{reprogramming_layer_forward.4} parent=0 // pred_check
    _
  $region3: #{reprogramming_layer_forward.4} parent=0 // pred_check_branch
    %9 = sbr.rel (0) target = $region5
  $region4: #{reprogramming_layer_forward.4} parent=0 // pred_region
    _
  $region5: #{reprogramming_layer_forward.4} parent=0 // pred_fallthru
    _
  // Predicated region
  $region6: #{reprogramming_layer_forward.4} parent=0 // pred_check
    _
  $region7: #{reprogramming_layer_forward.4} parent=0 // pred_check_branch
    %11 = sbr.rel (0) target = $region9
  $region8: #{reprogramming_layer_forward.4} parent=0 // pred_region
    _
  $region9: #{reprogramming_layer_forward.4} parent=0 // pred_fallthru
    _
  // Predicated region
  $region10: #{reprogramming_layer_forward.4} parent=0 // pred_check
    _
  $region11: #{reprogramming_layer_forward.4} parent=0 // pred_check_branch
    %13 = sbr.rel (0) target = $region13
  $region12: #{reprogramming_layer_forward.4} parent=0 // pred_region
    _
  $region13: #{reprogramming_layer_forward.4} parent=0 // pred_fallthru
    _
  %p14 = scmp.eq.s32.totalorder 0, 0
  // Predicated region
  $region14: #{reprogramming_layer_forward.4} parent=0 // pred_check
    %p15 = pneg %p14
  $region15: #{reprogramming_layer_forward.4} parent=0 // pred_check_branch
    %17 = sbr.rel (%p15) target = $region17
  $region16: #{reprogramming_layer_forward.4} parent=0 // pred_region
    %vm18 = vcmask 523264
    %19 = vst.msk [vmem:[#allocation2] sm:$0xff] %vm18, 0.0
    %20 = vst.msk [vmem:[#allocation2 + $0x8] sm:$0xff] %vm18, 0.0
  $region17: #{reprogramming_layer_forward.4} parent=0 // pred_fallthru
    _
  %v21 = vld [vmem:[#allocation2] sm:$0xff]
  %v22 = vld [vmem:[#allocation2 + $0x8] sm:$0xff]
  %v23 = vld [vmem:[%s0] sm:$0xff]
  %v24 = vld [vmem:[%s0 + $0x8] sm:$0xff]
  %v25 = vld [vmem:[%s1] sm:$0xff]
  %v26 = vld [vmem:[%s1 + $0x8] sm:$0xff]
  %v27 = vld [vmem:[%s1 + $0x10] sm:$0xff]
  %v28 = vld [vmem:[%s1 + $0x18] sm:$0xff]
  %v29 = vld [vmem:[%s1 + $0x20] sm:$0xff]
  %v30 = vld [vmem:[%s1 + $0x28] sm:$0xff]
  %v31 = vld [vmem:[%s1 + $0x30] sm:$0xff]
  %v32 = vld [vmem:[%s1 + $0x38] sm:$0xff]
  %vm33 = vcmask 261120
  %v35 = vsel %vm33, %v23, 0
  %v38 = vsel %vm33, %v24, 0
  %v41 = vsel %vm33, %v25, 0
  %v44 = vsel %vm33, %v26, 0
  %v47 = vsel %vm33, %v27, 0
  %v50 = vsel %vm33, %v28, 0
  %v53 = vsel %vm33, %v29, 0
  %v56 = vsel %vm33, %v30, 0
  %v59 = vsel %vm33, %v31, 0
  %v62 = vsel %vm33, %v32, 0
  %64 = vmatpush.xpose.msra.mxu0 0.0
  %65 = vmatpush.xpose.msra.mxu0 0.0
  %66 = vmatpush.xpose.msra.mxu0 0.0
  %67 = vmatpush.xpose.msra.mxu0 0.0
  %68 = vmatpush.xpose.msra.mxu0 0.0
  %69 = vmatpush.xpose.msra.mxu0 0.0
  %70 = vmatpush.xpose.msra.mxu0 0.0
  %71 = vmatpush.xpose.msra.mxu0 0.0
  %72 = vmatpush.xpose.msra.mxu0 %v62
  %73 = vmatpush.xpose.msra.mxu0 %v59
  %74 = vmatpush.xpose.msra.mxu0 %v56
  %75 = vmatpush.xpose.msra.mxu0 %v53
  %76 = vmatpush.xpose.msra.mxu0 %v50
  %77 = vmatpush.xpose.msra.mxu0 %v47
  %78 = vmatpush.xpose.msra.mxu0 %v44
  %79 = vmatpush.xpose.msra.mxu0 %v41
  %80 = vmatmul.f32.gmra.mxu0 %v35
  %v81 = vpop.f32.mrf.mxu0
  %v82 = vadd.f32 0.0, %v81
  %83 = vmatmul.f32.gmra.mxu0 %v38
  %v84 = vpop.f32.mrf.mxu0
  %v85 = vadd.f32 0.0, %v84
  %86 = vdwg.mxu0
  %v87 = vadd.f32 %v21, %v82
  %v88 = vadd.f32 %v22, %v85
  %vm89 = vcmask 523264
  %90 = vst.msk [vmem:[#allocation2] sm:$0xff] %vm89, %v87
  %91 = vst.msk [vmem:[#allocation2 + $0x8] sm:$0xff] %vm89, %v88
  // Predicated region
  $region18: #{reprogramming_layer_forward.4} parent=0 // pred_check
    %p92 = pneg %p14
  $region19: #{reprogramming_layer_forward.4} parent=0 // pred_check_branch
    %94 = sbr.rel (%p92) target = $region21
  $region20: #{reprogramming_layer_forward.4} parent=0 // pred_region
    %v95 = vld [vmem:[#allocation2] sm:$0xff]
    %v96 = vld [vmem:[#allocation2 + $0x8] sm:$0xff]
    %v97 = vld [vmem:[%s2] sm:$0x1]
    %v99 = vperm.slane %v97, 0
    %v101 = vadd.f32 %v95, %v99
    %v102 = vadd.f32 %v96, %v99
    %103 = vst.msk [vmem:[%s3] sm:$0xff] %vm89, %v101
    %104 = vst.msk [vmem:[%s3 + $0x8] sm:$0xff] %vm89, %v102
  $region21: #{reprogramming_layer_forward.4} parent=0 // pred_fallthru
    _
  // Predicated region
  $region22: #{reprogramming_layer_forward.4} parent=0 // pred_check
    _
  $region23: #{reprogramming_layer_forward.4} parent=0 // pred_check_branch
    %106 = sbr.rel (0) target = $region25
  $region24: #{reprogramming_layer_forward.4} parent=0 // pred_region
    _
  $region25: #{reprogramming_layer_forward.4} parent=0 // pred_fallthru
    _
  // Predicated region
  $region26: #{reprogramming_layer_forward.4} parent=0 // pred_check
    _
  $region27: #{reprogramming_layer_forward.4} parent=0 // pred_check_branch
    %108 = sbr.rel (0) target = $region29
  $region28: #{reprogramming_layer_forward.4} parent=0 // pred_region
    _
  $region29: #{reprogramming_layer_forward.4} parent=0 // pred_fallthru
    _

// kernel: reprogramming_layer_forward.5
$region0: #{reprogramming_layer_forward.5}
  #allocation0 [shape = 'u32[]', space=smem, size = 0x4, offset = 0x4, fixed_abs, tag = 'smem constant byte address 0x4 - core index']
  #allocation1 [shape = 'u32[72,128]{1,0:T(1,128)}', space=vmem, size = 0x9000, scoped, tag = 'internal scratch']
  #allocation2 [shape = 'f32[16,64]{1,0:T(8,128)}', space=vmem, size = 0x2000, scoped, tag = 'scratch operand']
  %s0 = inlined_call_operand.hbm [shape: f32[16,64], index: 0, kind: input, shape index: {}]
  %s1 = inlined_call_operand.vmem [shape: f32[64,64], index: 1, kind: input, shape index: {}]
  %s2 = inlined_call_operand.vmem [shape: f32[1,64], index: 2, kind: input, shape index: {}]
  %s3 = inlined_call_operand.vmem [shape: f32[16,64], index: 3, kind: output, shape index: {}]
  %s4 = sld [smem:[#allocation0]]
  $region34: #{reprogramming_layer_forward.5} parent=0
    _
  %s6 = ssub.s32 1, %s4
  %s7 = scalar_select 0, %s6, %s4
  $region1: #{reprogramming_layer_forward.5} parent=0
    #allocation3 [shape = 'u8[8192]{0}', space=vmem, size = 0x2000, scoped, tag = 'input window, operand 0, single buffered']
    #allocation4 [shape = 's32[1]{0}', space=sflag, size = 0x4, scoped, tag = 'scoped memory for reprogramming_layer_forward.5']
    %8 = vsyncpa [#allocation4], 0
    // Predicated region
    $region2: #{reprogramming_layer_forward.5} parent=1 // pred_check
      _
    $region3: #{reprogramming_layer_forward.5} parent=1 // pred_check_branch
      %10 = sbr.rel (0) target = $region5
    $region4: #{reprogramming_layer_forward.5} parent=1 // pred_region
      %12 = vsyncadd [#allocation4], 0
      %s13 = sshll.u32 %s0, 4
      %s14 = int_to_ptr.hbm [resolvable:$true] %s13
      %s15 = sshll.u32 [#allocation3], 4
      %s16 = int_to_ptr.vmem [resolvable:$true] %s15
      %21 = dma.hbm_to_vmem [thread:$0]  %s14, 256, %s16, [#allocation4], 128, 128, 8
    $region5: #{reprogramming_layer_forward.5} parent=1 // pred_fallthru
      _
    // Predicated region
    $region6: #{reprogramming_layer_forward.5} parent=1 // pred_check
      _
    $region7: #{reprogramming_layer_forward.5} parent=1 // pred_check_branch
      %23 = sbr.rel (0) target = $region9
    $region8: #{reprogramming_layer_forward.5} parent=1 // pred_region
      _
    $region9: #{reprogramming_layer_forward.5} parent=1 // pred_fallthru
      _
    // Predicated region
    $region10: #{reprogramming_layer_forward.5} parent=1 // pred_check
      _
    $region11: #{reprogramming_layer_forward.5} parent=1 // pred_check_branch
      %25 = sbr.rel (0) target = $region13
    $region12: #{reprogramming_layer_forward.5} parent=1 // pred_region
      _
    $region13: #{reprogramming_layer_forward.5} parent=1 // pred_fallthru
      _
    // Predicated region
    $region14: #{reprogramming_layer_forward.5} parent=1 // pred_check
      _
    $region15: #{reprogramming_layer_forward.5} parent=1 // pred_check_branch
      %27 = sbr.rel (0) target = $region17
    $region16: #{reprogramming_layer_forward.5} parent=1 // pred_region
      %29 = dma.done [#allocation4], 256
    $region17: #{reprogramming_layer_forward.5} parent=1 // pred_fallthru
      _
    %p30 = scmp.eq.s32.totalorder 0, 0
    // Predicated region
    $region18: #{reprogramming_layer_forward.5} parent=1 // pred_check
      %p31 = pneg %p30
    $region19: #{reprogramming_layer_forward.5} parent=1 // pred_check_branch
      %33 = sbr.rel (%p31) target = $region21
    $region20: #{reprogramming_layer_forward.5} parent=1 // pred_region
      %vm34 = vcmask 523264
      %35 = vst.msk [vmem:[#allocation2] sm:$0xff] %vm34, 0.0
      %36 = vst.msk [vmem:[#allocation2 + $0x8] sm:$0xff] %vm34, 0.0
    $region21: #{reprogramming_layer_forward.5} parent=1 // pred_fallthru
      _
    %v37 = vld [vmem:[#allocation2] sm:$0xff]
    %v38 = vld [vmem:[#allocation2 + $0x8] sm:$0xff]
    %v39 = vld [vmem:[#allocation3] sm:$0xff]
    %v40 = vld [vmem:[#allocation3 + $0x8] sm:$0xff]
    %v41 = vld [vmem:[%s1] sm:$0xff]
    %v42 = vld [vmem:[%s1 + $0x8] sm:$0xff]
    %v43 = vld [vmem:[%s1 + $0x10] sm:$0xff]
    %v44 = vld [vmem:[%s1 + $0x18] sm:$0xff]
    %v45 = vld [vmem:[%s1 + $0x20] sm:$0xff]
    %v46 = vld [vmem:[%s1 + $0x28] sm:$0xff]
    %v47 = vld [vmem:[%s1 + $0x30] sm:$0xff]
    %v48 = vld [vmem:[%s1 + $0x38] sm:$0xff]
    %vm49 = vcmask 523264
    %v51 = vsel %vm49, %v39, 0
    %v54 = vsel %vm49, %v40, 0
    %v57 = vsel %vm49, %v41, 0
    %v60 = vsel %vm49, %v42, 0
    %v63 = vsel %vm49, %v43, 0
    %v66 = vsel %vm49, %v44, 0
    %v69 = vsel %vm49, %v45, 0
    %v72 = vsel %vm49, %v46, 0
    %v75 = vsel %vm49, %v47, 0
    %v78 = vsel %vm49, %v48, 0
    %80 = vmatpush.xpose.msra.mxu0 0.0
    %81 = vmatpush.xpose.msra.mxu0 0.0
    %82 = vmatpush.xpose.msra.mxu0 0.0
    %83 = vmatpush.xpose.msra.mxu0 0.0
    %84 = vmatpush.xpose.msra.mxu0 0.0
    %85 = vmatpush.xpose.msra.mxu0 0.0
    %86 = vmatpush.xpose.msra.mxu0 0.0
    %87 = vmatpush.xpose.msra.mxu0 0.0
    %88 = vmatpush.xpose.msra.mxu0 %v78
    %89 = vmatpush.xpose.msra.mxu0 %v75
    %90 = vmatpush.xpose.msra.mxu0 %v72
    %91 = vmatpush.xpose.msra.mxu0 %v69
    %92 = vmatpush.xpose.msra.mxu0 %v66
    %93 = vmatpush.xpose.msra.mxu0 %v63
    %94 = vmatpush.xpose.msra.mxu0 %v60
    %95 = vmatpush.xpose.msra.mxu0 %v57
    %96 = vmatmul.f32.gmra.mxu0 %v51
    %v97 = vpop.f32.mrf.mxu0
    %v98 = vadd.f32 0.0, %v97
    %99 = vmatmul.f32.gmra.mxu0 %v54
    %v100 = vpop.f32.mrf.mxu0
    %v101 = vadd.f32 0.0, %v100
    %102 = vdwg.mxu0
    %v103 = vadd.f32 %v37, %v98
    %v104 = vadd.f32 %v38, %v101
    %105 = vst.msk [vmem:[#allocation2] sm:$0xff] %vm49, %v103
    %106 = vst.msk [vmem:[#allocation2 + $0x8] sm:$0xff] %vm49, %v104
    // Predicated region
    $region22: #{reprogramming_layer_forward.5} parent=1 // pred_check
      %p107 = pneg %p30
    $region23: #{reprogramming_layer_forward.5} parent=1 // pred_check_branch
      %109 = sbr.rel (%p107) target = $region25
    $region24: #{reprogramming_layer_forward.5} parent=1 // pred_region
      %v110 = vld [vmem:[#allocation2] sm:$0xff]
      %v111 = vld [vmem:[#allocation2 + $0x8] sm:$0xff]
      %v112 = vld [vmem:[%s2] sm:$0x1]
      %v114 = vperm.slane %v112, 0
      %v116 = vadd.f32 %v110, %v114
      %v117 = vadd.f32 %v111, %v114
      %118 = vst.msk [vmem:[%s3] sm:$0xff] %vm49, %v116
      %119 = vst.msk [vmem:[%s3 + $0x8] sm:$0xff] %vm49, %v117
    $region25: #{reprogramming_layer_forward.5} parent=1 // pred_fallthru
      _
    // Predicated region
    $region26: #{reprogramming_layer_forward.5} parent=1 // pred_check
      _
    $region27: #{reprogramming_layer_forward.5} parent=1 // pred_check_branch
      %121 = sbr.rel (0) target = $region29
    $region28: #{reprogramming_layer_forward.5} parent=1 // pred_region
      _
    $region29: #{reprogramming_layer_forward.5} parent=1 // pred_fallthru
      _
    // Predicated region
    $region30: #{reprogramming_layer_forward.5} parent=1 // pred_check
      _
    $region31: #{reprogramming_layer_forward.5} parent=1 // pred_check_branch
      %123 = sbr.rel (0) target = $region33
    $region32: #{reprogramming_layer_forward.5} parent=1 // pred_region
      _
    $region33: #{reprogramming_layer_forward.5} parent=1 // pred_fallthru
      _
    %124 = vsyncpa [#allocation4], 1

// kernel: reprogramming_layer_forward.7
$region0: #{reprogramming_layer_forward.7}
  #allocation0 [shape = 'u32[]', space=smem, size = 0x4, offset = 0x4, fixed_abs, tag = 'smem constant byte address 0x4 - core index']
  #allocation1 [shape = 'u32[72,128]{1,0:T(1,128)}', space=vmem, size = 0x9000, scoped, tag = 'internal scratch']
  %s0 = inlined_call_operand.vmem [shape: f32[2], index: 0, kind: input, shape index: {}]
  %s1 = inlined_call_operand.vmem [shape: f32[16,64], index: 1, kind: input, shape index: {}]
  %s2 = inlined_call_operand.vmem [shape: f32[64,16], index: 2, kind: input, shape index: {}]
  %s3 = inlined_call_operand.vmem [shape: f32[16,64], index: 3, kind: input, shape index: {}]
  %s4 = inlined_call_operand.vmem [shape: f32[32,64], index: 4, kind: input, shape index: {}]
  %s5 = inlined_call_operand.vmem [shape: f32[1,64], index: 5, kind: input, shape index: {}]
  %s6 = inlined_call_operand.hbm [shape: f32[16,64], index: 6, kind: output, shape index: {}]
  %s7 = sld [smem:[#allocation0]]
  $region38: #{reprogramming_layer_forward.7} parent=0
    _
  %s9 = ssub.s32 1, %s7
  %s10 = scalar_select 0, %s9, %s7
  $region1: #{reprogramming_layer_forward.7} parent=0
    #allocation2 [shape = 'u8[512]{0}', space=smem, size = 0x200, scoped, tag = 'input window, operand 0, single buffered']
    #allocation3 [shape = 's32[1]{0}', space=sflag, size = 0x4, scoped, tag = 'scoped memory for reprogramming_layer_forward.7']
    #allocation4 [shape = 's32[1]{0}', space=sflag, size = 0x4, scoped, tag = 'scoped memory for reprogramming_layer_forward.7']
    #allocation5 [shape = 'u8[8192]{0}', space=vmem, size = 0x2000, scoped, tag = 'output window, operand 0, single buffered']
    %11 = vsyncpa [#allocation4], 0
    %12 = vsyncpa [#allocation3], 0
    // Predicated region
    $region2: #{reprogramming_layer_forward.7} parent=1 // pred_check
      _
    $region3: #{reprogramming_layer_forward.7} parent=1 // pred_check_branch
      %14 = sbr.rel (0) target = $region5
    $region4: #{reprogramming_layer_forward.7} parent=1 // pred_region
      %16 = vsyncadd [#allocation4], 0
      %s18 = sshll.u32 %s0, 4
      %s19 = int_to_ptr.vmem [resolvable:$true] %s18
      %21 = dma.vmem_to_smem %s19, 16, [#allocation2], [#allocation4]
    $region5: #{reprogramming_layer_forward.7} parent=1 // pred_fallthru
      _
    // Predicated region
    $region6: #{reprogramming_layer_forward.7} parent=1 // pred_check
      _
    $region7: #{reprogramming_layer_forward.7} parent=1 // pred_check_branch
      %23 = sbr.rel (0) target = $region9
    $region8: #{reprogramming_layer_forward.7} parent=1 // pred_region
      _
    $region9: #{reprogramming_layer_forward.7} parent=1 // pred_fallthru
      _
    // Predicated region
    $region10: #{reprogramming_layer_forward.7} parent=1 // pred_check
      _
    $region11: #{reprogramming_layer_forward.7} parent=1 // pred_check_branch
      %25 = sbr.rel (0) target = $region13
    $region12: #{reprogramming_layer_forward.7} parent=1 // pred_region
      _
    $region13: #{reprogramming_layer_forward.7} parent=1 // pred_fallthru
      _
    // Predicated region
    $region14: #{reprogramming_layer_forward.7} parent=1 // pred_check
      _
    $region15: #{reprogramming_layer_forward.7} parent=1 // pred_check_branch
      %27 = sbr.rel (0) target = $region17
    $region16: #{reprogramming_layer_forward.7} parent=1 // pred_region
      _
    $region17: #{reprogramming_layer_forward.7} parent=1 // pred_fallthru
      _
    // Predicated region
    $region18: #{reprogramming_layer_forward.7} parent=1 // pred_check
      _
    $region19: #{reprogramming_layer_forward.7} parent=1 // pred_check_branch
      %29 = sbr.rel (0) target = $region21
    $region20: #{reprogramming_layer_forward.7} parent=1 // pred_region
      _
    $region21: #{reprogramming_layer_forward.7} parent=1 // pred_fallthru
      _
    // Predicated region
    $region22: #{reprogramming_layer_forward.7} parent=1 // pred_check
      _
    $region23: #{reprogramming_layer_forward.7} parent=1 // pred_check_branch
      %31 = sbr.rel (0) target = $region25
    $region24: #{reprogramming_layer_forward.7} parent=1 // pred_region
      _
    $region25: #{reprogramming_layer_forward.7} parent=1 // pred_fallthru
      _
    // Predicated region
    $region26: #{reprogramming_layer_forward.7} parent=1 // pred_check
      _
    $region27: #{reprogramming_layer_forward.7} parent=1 // pred_check_branch
      %33 = sbr.rel (0) target = $region29
    $region28: #{reprogramming_layer_forward.7} parent=1 // pred_region
      %35 = dma.done [#allocation4], 16
    $region29: #{reprogramming_layer_forward.7} parent=1 // pred_fallthru
      _
    %36 = sfence
    %s37 = sld [smem:[#allocation2]]
    %s38 = sld [smem:[#allocation2 + $0x1]]
    %v39 = vld [vmem:[%s1] sm:$0xff]
    %v40 = vld [vmem:[%s1 + $0x8] sm:$0xff]
    %v41 = vld [vmem:[%s2] sm:$0xff]
    %v42 = vld [vmem:[%s3] sm:$0xff]
    %v43 = vld [vmem:[%s3 + $0x8] sm:$0xff]
    %vm44 = vcmask 64512
    %v46 = vsel %vm44, %v39, 0
    %v49 = vsel %vm44, %v40, 0
    %51 = vmatpush.msra.mxu0 0.0
    %52 = vmatpush.msra.mxu0 0.0
    %53 = vmatpush.msra.mxu0 0.0
    %54 = vmatpush.msra.mxu0 0.0
    %55 = vmatpush.msra.mxu0 0.0
    %56 = vmatpush.msra.mxu0 0.0
    %57 = vmatpush.msra.mxu0 0.0
    %58 = vmatpush.msra.mxu0 0.0
    %59 = vmatpush.msra.mxu0 0.0
    %60 = vmatpush.msra.mxu0 0.0
    %61 = vmatpush.msra.mxu0 0.0
    %62 = vmatpush.msra.mxu0 0.0
    %63 = vmatpush.msra.mxu0 0.0
    %64 = vmatpush.msra.mxu0 0.0
    %65 = vmatpush.msra.mxu0 0.0
    %66 = vmatpush.msra.mxu0 %v41
    %67 = vmatmul.f32.gmra.mxu0 %v46
    %v68 = vpop.f32.mrf.mxu0
    %v69 = vadd.f32 0.0, %v68
    %70 = vmatmul.f32.gmra.mxu0 %v49
    %v71 = vpop.f32.mrf.mxu0
    %v72 = vadd.f32 0.0, %v71
    %73 = vdwg.mxu0
    %v74 = vmul.f32 %v69, 0.35355338
    %v75 = vmul.f32 %v72, 0.35355338
    %vm76 = vcmask 130048
    %v77 = vsel %vm76, %v74, -inf
    %78 = vmax.xlane.f32.xlu0 %v77
    %v79 = vpop.xlane.xlu0 %78
    %v80 = vsel %vm76, %v75, -inf
    %81 = vmax.xlane.f32.xlu0 %v80
    %v82 = vpop.xlane.xlu0 %81
    %v83 = vsub.f32 %v74, %v79
    %v84 = vsub.f32 %v75, %v82
    %v85 = vmul.f32 %v83, 1.442695
    %v86 = vpow.pop %v85
    %v87 = vmul.f32 %v84, 1.442695
    %v88 = vpow.pop %v87
    %v89 = vsel %vm76, %v86, 0.0
    %90 = vadd.xlane.f32.xlu0 %v89
    %v91 = vpop.xlane.xlu0 %90
    %v92 = vsel %vm76, %v88, 0.0
    %93 = vadd.xlane.f32.xlu0 %v92
    %v94 = vpop.xlane.xlu0 %93
    %v95 = vrcp.pop %v91
    %v96 = vrcp.pop %v94
    %v98 = vsel %vm76, %v86, 0
    %v101 = vsel %vm76, %v88, 0
    %103 = vmatpush.msra.mxu0 0.0
    %104 = vmatpush.msra.mxu0 0.0
    %105 = vmatpush.msra.mxu0 0.0
    %106 = vmatpush.msra.mxu0 0.0
    %107 = vmatpush.msra.mxu0 0.0
    %108 = vmatpush.msra.mxu0 0.0
    %109 = vmatpush.msra.mxu0 0.0
    %110 = vmatpush.msra.mxu0 0.0
    %111 = vmatpush.msra.mxu0 0.0
    %112 = vmatpush.msra.mxu0 0.0
    %113 = vmatpush.msra.mxu0 0.0
    %114 = vmatpush.msra.mxu0 0.0
    %115 = vmatpush.msra.mxu0 0.0
    %116 = vmatpush.msra.mxu0 0.0
    %117 = vmatpush.msra.mxu0 %v43
    %118 = vmatpush.msra.mxu0 %v42
    %119 = vmatmul.f32.gmra.mxu0 %v98
    %v120 = vpop.f32.mrf.mxu0
    %v121 = vadd.f32 0.0, %v120
    %122 = vmatmul.f32.gmra.mxu0 %v101
    %v123 = vpop.f32.mrf.mxu0
    %v124 = vadd.f32 0.0, %v123
    %125 = vdwg.mxu0
    %v126 = vmul.f32 %v121, %v95
    %v127 = vmul.f32 %v124, %v96
    %v128 = vld [vmem:[%s2 + $0x20] sm:$0xff]
    %129 = vrot.lane.b32.xlu0 %v39, 96
    %v130 = vpop.permute.xlu0 %129
    %131 = vrot.lane.b32.xlu0 %v40, 96
    %v132 = vpop.permute.xlu0 %131
    %v133 = vsel %vm44, %v130, 0
    %v135 = vsel %vm44, %v132, 0
    %137 = vmatpush.msra.mxu0 0.0
    %138 = vmatpush.msra.mxu0 0.0
    %139 = vmatpush.msra.mxu0 0.0
    %140 = vmatpush.msra.mxu0 0.0
    %141 = vmatpush.msra.mxu0 0.0
    %142 = vmatpush.msra.mxu0 0.0
    %143 = vmatpush.msra.mxu0 0.0
    %144 = vmatpush.msra.mxu0 0.0
    %145 = vmatpush.msra.mxu0 0.0
    %146 = vmatpush.msra.mxu0 0.0
    %147 = vmatpush.msra.mxu0 0.0
    %148 = vmatpush.msra.mxu0 0.0
    %149 = vmatpush.msra.mxu0 0.0
    %150 = vmatpush.msra.mxu0 0.0
    %151 = vmatpush.msra.mxu0 0.0
    %152 = vmatpush.msra.mxu0 %v128
    %153 = vmatmul.f32.gmra.mxu0 %v133
    %v154 = vpop.f32.mrf.mxu0
    %v155 = vadd.f32 0.0, %v154
    %156 = vmatmul.f32.gmra.mxu0 %v135
    %v157 = vpop.f32.mrf.mxu0
    %v158 = vadd.f32 0.0, %v157
    %159 = vdwg.mxu0
    %v160 = vmul.f32 %v155, 0.35355338
    %v161 = vmul.f32 %v158, 0.35355338
    %v162 = vsel %vm76, %v160, -inf
    %163 = vmax.xlane.f32.xlu0 %v162
    %v164 = vpop.xlane.xlu0 %163
    %v165 = vsel %vm76, %v161, -inf
    %166 = vmax.xlane.f32.xlu0 %v165
    %v167 = vpop.xlane.xlu0 %166
    %v168 = vsub.f32 %v160, %v164
    %v169 = vsub.f32 %v161, %v167
    %v170 = vmul.f32 %v168, 1.442695
    %v171 = vpow.pop %v170
    %v172 = vmul.f32 %v169, 1.442695
    %v173 = vpow.pop %v172
    %v174 = vsel %vm76, %v171, 0.0
    %175 = vadd.xlane.f32.xlu0 %v174
    %v176 = vpop.xlane.xlu0 %175
    %v177 = vsel %vm76, %v173, 0.0
    %178 = vadd.xlane.f32.xlu0 %v177
    %v179 = vpop.xlane.xlu0 %178
    %v180 = vrcp.pop %v176
    %v181 = vrcp.pop %v179
    %184 = vrot.lane.b32.xlu0 %v42, 96
    %v185 = vpop.permute.xlu0 %184
    %186 = vrot.lane.b32.xlu0 %v43, 96
    %v187 = vpop.permute.xlu0 %186
    %v191 = vsel %vm76, %v171, 0
    %v194 = vsel %vm76, %v173, 0
    %196 = vmatpush.msra.mxu0 0.0
    %197 = vmatpush.msra.mxu0 0.0
    %198 = vmatpush.msra.mxu0 0.0
    %199 = vmatpush.msra.mxu0 0.0
    %200 = vmatpush.msra.mxu0 0.0
    %201 = vmatpush.msra.mxu0 0.0
    %202 = vmatpush.msra.mxu0 0.0
    %203 = vmatpush.msra.mxu0 0.0
    %204 = vmatpush.msra.mxu0 0.0
    %205 = vmatpush.msra.mxu0 0.0
    %206 = vmatpush.msra.mxu0 0.0
    %207 = vmatpush.msra.mxu0 0.0
    %208 = vmatpush.msra.mxu0 0.0
    %209 = vmatpush.msra.mxu0 0.0
    %210 = vmatpush.msra.mxu0 %v187
    %211 = vmatpush.msra.mxu0 %v185
    %212 = vmatmul.f32.gmra.mxu0 %v191
    %v213 = vpop.f32.mrf.mxu0
    %v214 = vadd.f32 0.0, %v213
    %215 = vmatmul.f32.gmra.mxu0 %v194
    %v216 = vpop.f32.mrf.mxu0
    %v217 = vadd.f32 0.0, %v216
    %218 = vdwg.mxu0
    %v219 = vmul.f32 %v214, %v180
    %v220 = vmul.f32 %v217, %v181
    %v221 = vstv %s37
    %v222 = vmul.f32 %v221, %v126
    %v223 = vmul.f32 %v221, %v127
    %v224 = vstv %s38
    %v225 = vmul.f32 %v224, %v219
    %v226 = vmul.f32 %v224, %v220
    %v227 = vadd.f32 %v222, %v225
    %v228 = vadd.f32 %v223, %v226
    %v229 = vld [vmem:[%s2 + $0x8] sm:$0xff]
    %230 = vrot.lane.b32.xlu0 %v39, 120
    %v231 = vpop.permute.xlu0 %230
    %232 = vrot.lane.b32.xlu0 %v40, 120
    %v233 = vpop.permute.xlu0 %232
    %v234 = vsel %vm44, %v231, 0
    %v236 = vsel %vm44, %v233, 0
    %238 = vmatpush.msra.mxu0 0.0
    %239 = vmatpush.msra.mxu0 0.0
    %240 = vmatpush.msra.mxu0 0.0
    %241 = vmatpush.msra.mxu0 0.0
    %242 = vmatpush.msra.mxu0 0.0
    %243 = vmatpush.msra.mxu0 0.0
    %244 = vmatpush.msra.mxu0 0.0
    %245 = vmatpush.msra.mxu0 0.0
    %246 = vmatpush.msra.mxu0 0.0
    %247 = vmatpush.msra.mxu0 0.0
    %248 = vmatpush.msra.mxu0 0.0
    %249 = vmatpush.msra.mxu0 0.0
    %250 = vmatpush.msra.mxu0 0.0
    %251 = vmatpush.msra.mxu0 0.0
    %252 = vmatpush.msra.mxu0 0.0
    %253 = vmatpush.msra.mxu0 %v229
    %254 = vmatmul.f32.gmra.mxu0 %v234
    %v255 = vpop.f32.mrf.mxu0
    %v256 = vadd.f32 0.0, %v255
    %257 = vmatmul.f32.gmra.mxu0 %v236
    %v258 = vpop.f32.mrf.mxu0
    %v259 = vadd.f32 0.0, %v258
    %260 = vdwg.mxu0
    %v261 = vmul.f32 %v256, 0.35355338
    %v262 = vmul.f32 %v259, 0.35355338
    %v263 = vsel %vm76, %v261, -inf
    %264 = vmax.xlane.f32.xlu0 %v263
    %v265 = vpop.xlane.xlu0 %264
    %v266 = vsel %vm76, %v262, -inf
    %267 = vmax.xlane.f32.xlu0 %v266
    %v268 = vpop.xlane.xlu0 %267
    %v269 = vsub.f32 %v261, %v265
    %v270 = vsub.f32 %v262, %v268
    %v271 = vmul.f32 %v269, 1.442695
    %v272 = vpow.pop %v271
    %v273 = vmul.f32 %v270, 1.442695
    %v274 = vpow.pop %v273
    %v275 = vsel %vm76, %v272, 0.0
    %276 = vadd.xlane.f32.xlu0 %v275
    %v277 = vpop.xlane.xlu0 %276
    %v278 = vsel %vm76, %v274, 0.0
    %279 = vadd.xlane.f32.xlu0 %v278
    %v280 = vpop.xlane.xlu0 %279
    %v281 = vrcp.pop %v277
    %v282 = vrcp.pop %v280
    %283 = vrot.lane.b32.xlu0 %v42, 120
    %v284 = vpop.permute.xlu0 %283
    %285 = vrot.lane.b32.xlu0 %v43, 120
    %v286 = vpop.permute.xlu0 %285
    %v290 = vsel %vm76, %v272, 0
    %v293 = vsel %vm76, %v274, 0
    %295 = vmatpush.msra.mxu0 0.0
    %296 = vmatpush.msra.mxu0 0.0
    %297 = vmatpush.msra.mxu0 0.0
    %298 = vmatpush.msra.mxu0 0.0
    %299 = vmatpush.msra.mxu0 0.0
    %300 = vmatpush.msra.mxu0 0.0
    %301 = vmatpush.msra.mxu0 0.0
    %302 = vmatpush.msra.mxu0 0.0
    %303 = vmatpush.msra.mxu0 0.0
    %304 = vmatpush.msra.mxu0 0.0
    %305 = vmatpush.msra.mxu0 0.0
    %306 = vmatpush.msra.mxu0 0.0
    %307 = vmatpush.msra.mxu0 0.0
    %308 = vmatpush.msra.mxu0 0.0
    %309 = vmatpush.msra.mxu0 %v286
    %310 = vmatpush.msra.mxu0 %v284
    %311 = vmatmul.f32.gmra.mxu0 %v290
    %v312 = vpop.f32.mrf.mxu0
    %v313 = vadd.f32 0.0, %v312
    %314 = vmatmul.f32.gmra.mxu0 %v293
    %v315 = vpop.f32.mrf.mxu0
    %v316 = vadd.f32 0.0, %v315
    %317 = vdwg.mxu0
    %v318 = vmul.f32 %v313, %v281
    %v319 = vmul.f32 %v316, %v282
    %v320 = vld [vmem:[%s2 + $0x28] sm:$0xff]
    %321 = vrot.lane.b32.xlu0 %v39, 88
    %v322 = vpop.permute.xlu0 %321
    %323 = vrot.lane.b32.xlu0 %v40, 88
    %v324 = vpop.permute.xlu0 %323
    %v325 = vsel %vm44, %v322, 0
    %v327 = vsel %vm44, %v324, 0
    %329 = vmatpush.msra.mxu0 0.0
    %330 = vmatpush.msra.mxu0 0.0
    %331 = vmatpush.msra.mxu0 0.0
    %332 = vmatpush.msra.mxu0 0.0
    %333 = vmatpush.msra.mxu0 0.0
    %334 = vmatpush.msra.mxu0 0.0
    %335 = vmatpush.msra.mxu0 0.0
    %336 = vmatpush.msra.mxu0 0.0
    %337 = vmatpush.msra.mxu0 0.0
    %338 = vmatpush.msra.mxu0 0.0
    %339 = vmatpush.msra.mxu0 0.0
    %340 = vmatpush.msra.mxu0 0.0
    %341 = vmatpush.msra.mxu0 0.0
    %342 = vmatpush.msra.mxu0 0.0
    %343 = vmatpush.msra.mxu0 0.0
    %344 = vmatpush.msra.mxu0 %v320
    %345 = vmatmul.f32.gmra.mxu0 %v325
    %v346 = vpop.f32.mrf.mxu0
    %v347 = vadd.f32 0.0, %v346
    %348 = vmatmul.f32.gmra.mxu0 %v327
    %v349 = vpop.f32.mrf.mxu0
    %v350 = vadd.f32 0.0, %v349
    %351 = vdwg.mxu0
    %v352 = vmul.f32 %v347, 0.35355338
    %v353 = vmul.f32 %v350, 0.35355338
    %v354 = vsel %vm76, %v352, -inf
    %355 = vmax.xlane.f32.xlu0 %v354
    %v356 = vpop.xlane.xlu0 %355
    %v357 = vsel %vm76, %v353, -inf
    %358 = vmax.xlane.f32.xlu0 %v357
    %v359 = vpop.xlane.xlu0 %358
    %v360 = vsub.f32 %v352, %v356
    %v361 = vsub.f32 %v353, %v359
    %v362 = vmul.f32 %v360, 1.442695
    %v363 = vpow.pop %v362
    %v364 = vmul.f32 %v361, 1.442695
    %v365 = vpow.pop %v364
    %v366 = vsel %vm76, %v363, 0.0
    %367 = vadd.xlane.f32.xlu0 %v366
    %v368 = vpop.xlane.xlu0 %367
    %v369 = vsel %vm76, %v365, 0.0
    %370 = vadd.xlane.f32.xlu0 %v369
    %v371 = vpop.xlane.xlu0 %370
    %v372 = vrcp.pop %v368
    %v373 = vrcp.pop %v371
    %374 = vrot.lane.b32.xlu0 %v42, 88
    %v375 = vpop.permute.xlu0 %374
    %376 = vrot.lane.b32.xlu0 %v43, 88
    %v377 = vpop.permute.xlu0 %376
    %v381 = vsel %vm76, %v363, 0
    %v384 = vsel %vm76, %v365, 0
    %386 = vmatpush.msra.mxu0 0.0
    %387 = vmatpush.msra.mxu0 0.0
    %388 = vmatpush.msra.mxu0 0.0
    %389 = vmatpush.msra.mxu0 0.0
    %390 = vmatpush.msra.mxu0 0.0
    %391 = vmatpush.msra.mxu0 0.0
    %392 = vmatpush.msra.mxu0 0.0
    %393 = vmatpush.msra.mxu0 0.0
    %394 = vmatpush.msra.mxu0 0.0
    %395 = vmatpush.msra.mxu0 0.0
    %396 = vmatpush.msra.mxu0 0.0
    %397 = vmatpush.msra.mxu0 0.0
    %398 = vmatpush.msra.mxu0 0.0
    %399 = vmatpush.msra.mxu0 0.0
    %400 = vmatpush.msra.mxu0 %v377
    %401 = vmatpush.msra.mxu0 %v375
    %402 = vmatmul.f32.gmra.mxu0 %v381
    %v403 = vpop.f32.mrf.mxu0
    %v404 = vadd.f32 0.0, %v403
    %405 = vmatmul.f32.gmra.mxu0 %v384
    %v406 = vpop.f32.mrf.mxu0
    %v407 = vadd.f32 0.0, %v406
    %408 = vdwg.mxu0
    %v409 = vmul.f32 %v404, %v372
    %v410 = vmul.f32 %v407, %v373
    %v411 = vmul.f32 %v221, %v318
    %v412 = vmul.f32 %v221, %v319
    %v413 = vmul.f32 %v224, %v409
    %v414 = vmul.f32 %v224, %v410
    %v415 = vadd.f32 %v411, %v413
    %v416 = vadd.f32 %v412, %v414
    %v417 = vld [vmem:[%s2 + $0x10] sm:$0xff]
    %418 = vrot.lane.b32.xlu0 %v39, 112
    %v419 = vpop.permute.xlu0 %418
    %420 = vrot.lane.b32.xlu0 %v40, 112
    %v421 = vpop.permute.xlu0 %420
    %v422 = vsel %vm44, %v419, 0
    %v424 = vsel %vm44, %v421, 0
    %426 = vmatpush.msra.mxu0 0.0
    %427 = vmatpush.msra.mxu0 0.0
    %428 = vmatpush.msra.mxu0 0.0
    %429 = vmatpush.msra.mxu0 0.0
    %430 = vmatpush.msra.mxu0 0.0
    %431 = vmatpush.msra.mxu0 0.0
    %432 = vmatpush.msra.mxu0 0.0
    %433 = vmatpush.msra.mxu0 0.0
    %434 = vmatpush.msra.mxu0 0.0
    %435 = vmatpush.msra.mxu0 0.0
    %436 = vmatpush.msra.mxu0 0.0
    %437 = vmatpush.msra.mxu0 0.0
    %438 = vmatpush.msra.mxu0 0.0
    %439 = vmatpush.msra.mxu0 0.0
    %440 = vmatpush.msra.mxu0 0.0
    %441 = vmatpush.msra.mxu0 %v417
    %442 = vmatmul.f32.gmra.mxu0 %v422
    %v443 = vpop.f32.mrf.mxu0
    %v444 = vadd.f32 0.0, %v443
    %445 = vmatmul.f32.gmra.mxu0 %v424
    %v446 = vpop.f32.mrf.mxu0
    %v447 = vadd.f32 0.0, %v446
    %448 = vdwg.mxu0
    %v449 = vmul.f32 %v444, 0.35355338
    %v450 = vmul.f32 %v447, 0.35355338
    %v451 = vsel %vm76, %v449, -inf
    %452 = vmax.xlane.f32.xlu0 %v451
    %v453 = vpop.xlane.xlu0 %452
    %v454 = vsel %vm76, %v450, -inf
    %455 = vmax.xlane.f32.xlu0 %v454
    %v456 = vpop.xlane.xlu0 %455
    %v457 = vsub.f32 %v449, %v453
    %v458 = vsub.f32 %v450, %v456
    %v459 = vmul.f32 %v457, 1.442695
    %v460 = vpow.pop %v459
    %v461 = vmul.f32 %v458, 1.442695
    %v462 = vpow.pop %v461
    %v463 = vsel %vm76, %v460, 0.0
    %464 = vadd.xlane.f32.xlu0 %v463
    %v465 = vpop.xlane.xlu0 %464
    %v466 = vsel %vm76, %v462, 0.0
    %467 = vadd.xlane.f32.xlu0 %v466
    %v468 = vpop.xlane.xlu0 %467
    %v469 = vrcp.pop %v465
    %v470 = vrcp.pop %v468
    %471 = vrot.lane.b32.xlu0 %v42, 112
    %v472 = vpop.permute.xlu0 %471
    %473 = vrot.lane.b32.xlu0 %v43, 112
    %v474 = vpop.permute.xlu0 %473
    %v478 = vsel %vm76, %v460, 0
    %v481 = vsel %vm76, %v462, 0
    %483 = vmatpush.msra.mxu0 0.0
    %484 = vmatpush.msra.mxu0 0.0
    %485 = vmatpush.msra.mxu0 0.0
    %486 = vmatpush.msra.mxu0 0.0
    %487 = vmatpush.msra.mxu0 0.0
    %488 = vmatpush.msra.mxu0 0.0
    %489 = vmatpush.msra.mxu0 0.0
    %490 = vmatpush.msra.mxu0 0.0
    %491 = vmatpush.msra.mxu0 0.0
    %492 = vmatpush.msra.mxu0 0.0
    %493 = vmatpush.msra.mxu0 0.0
    %494 = vmatpush.msra.mxu0 0.0
    %495 = vmatpush.msra.mxu0 0.0
    %496 = vmatpush.msra.mxu0 0.0
    %497 = vmatpush.msra.mxu0 %v474
    %498 = vmatpush.msra.mxu0 %v472
    %499 = vmatmul.f32.gmra.mxu0 %v478
    %v500 = vpop.f32.mrf.mxu0
    %v501 = vadd.f32 0.0, %v500
    %502 = vmatmul.f32.gmra.mxu0 %v481
    %v503 = vpop.f32.mrf.mxu0
    %v504 = vadd.f32 0.0, %v503
    %505 = vdwg.mxu0
    %v506 = vmul.f32 %v501, %v469
    %v507 = vmul.f32 %v504, %v470
    %v508 = vld [vmem:[%s2 + $0x30] sm:$0xff]
    %509 = vrot.lane.b32.xlu0 %v39, 80
    %v510 = vpop.permute.xlu0 %509
    %511 = vrot.lane.b32.xlu0 %v40, 80
    %v512 = vpop.permute.xlu0 %511
    %v513 = vsel %vm44, %v510, 0
    %v515 = vsel %vm44, %v512, 0
    %517 = vmatpush.msra.mxu0 0.0
    %518 = vmatpush.msra.mxu0 0.0
    %519 = vmatpush.msra.mxu0 0.0
    %520 = vmatpush.msra.mxu0 0.0
    %521 = vmatpush.msra.mxu0 0.0
    %522 = vmatpush.msra.mxu0 0.0
    %523 = vmatpush.msra.mxu0 0.0
    %524 = vmatpush.msra.mxu0 0.0
    %525 = vmatpush.msra.mxu0 0.0
    %526 = vmatpush.msra.mxu0 0.0
    %527 = vmatpush.msra.mxu0 0.0
    %528 = vmatpush.msra.mxu0 0.0
    %529 = vmatpush.msra.mxu0 0.0
    %530 = vmatpush.msra.mxu0 0.0
    %531 = vmatpush.msra.mxu0 0.0
    %532 = vmatpush.msra.mxu0 %v508
    %533 = vmatmul.f32.gmra.mxu0 %v513
    %v534 = vpop.f32.mrf.mxu0
    %v535 = vadd.f32 0.0, %v534
    %536 = vmatmul.f32.gmra.mxu0 %v515
    %v537 = vpop.f32.mrf.mxu0
    %v538 = vadd.f32 0.0, %v537
    %539 = vdwg.mxu0
    %v540 = vmul.f32 %v535, 0.35355338
    %v541 = vmul.f32 %v538, 0.35355338
    %v542 = vsel %vm76, %v540, -inf
    %543 = vmax.xlane.f32.xlu0 %v542
    %v544 = vpop.xlane.xlu0 %543
    %v545 = vsel %vm76, %v541, -inf
    %546 = vmax.xlane.f32.xlu0 %v545
    %v547 = vpop.xlane.xlu0 %546
    %v548 = vsub.f32 %v540, %v544
    %v549 = vsub.f32 %v541, %v547
    %v550 = vmul.f32 %v548, 1.442695
    %v551 = vpow.pop %v550
    %v552 = vmul.f32 %v549, 1.442695
    %v553 = vpow.pop %v552
    %v554 = vsel %vm76, %v551, 0.0
    %555 = vadd.xlane.f32.xlu0 %v554
    %v556 = vpop.xlane.xlu0 %555
    %v557 = vsel %vm76, %v553, 0.0
    %558 = vadd.xlane.f32.xlu0 %v557
    %v559 = vpop.xlane.xlu0 %558
    %v560 = vrcp.pop %v556
    %v561 = vrcp.pop %v559
    %562 = vrot.lane.b32.xlu0 %v42, 80
    %v563 = vpop.permute.xlu0 %562
    %564 = vrot.lane.b32.xlu0 %v43, 80
    %v565 = vpop.permute.xlu0 %564
    %v569 = vsel %vm76, %v551, 0
    %v572 = vsel %vm76, %v553, 0
    %574 = vmatpush.msra.mxu0 0.0
    %575 = vmatpush.msra.mxu0 0.0
    %576 = vmatpush.msra.mxu0 0.0
    %577 = vmatpush.msra.mxu0 0.0
    %578 = vmatpush.msra.mxu0 0.0
    %579 = vmatpush.msra.mxu0 0.0
    %580 = vmatpush.msra.mxu0 0.0
    %581 = vmatpush.msra.mxu0 0.0
    %582 = vmatpush.msra.mxu0 0.0
    %583 = vmatpush.msra.mxu0 0.0
    %584 = vmatpush.msra.mxu0 0.0
    %585 = vmatpush.msra.mxu0 0.0
    %586 = vmatpush.msra.mxu0 0.0
    %587 = vmatpush.msra.mxu0 0.0
    %588 = vmatpush.msra.mxu0 %v565
    %589 = vmatpush.msra.mxu0 %v563
    %590 = vmatmul.f32.gmra.mxu0 %v569
    %v591 = vpop.f32.mrf.mxu0
    %v592 = vadd.f32 0.0, %v591
    %593 = vmatmul.f32.gmra.mxu0 %v572
    %v594 = vpop.f32.mrf.mxu0
    %v595 = vadd.f32 0.0, %v594
    %596 = vdwg.mxu0
    %v597 = vmul.f32 %v592, %v560
    %v598 = vmul.f32 %v595, %v561
    %v599 = vmul.f32 %v221, %v506
    %v600 = vmul.f32 %v221, %v507
    %v601 = vmul.f32 %v224, %v597
    %v602 = vmul.f32 %v224, %v598
    %v603 = vadd.f32 %v599, %v601
    %v604 = vadd.f32 %v600, %v602
    %v605 = vld [vmem:[%s2 + $0x18] sm:$0xff]
    %606 = vrot.lane.b32.xlu0 %v39, 104
    %v607 = vpop.permute.xlu0 %606
    %608 = vrot.lane.b32.xlu0 %v40, 104
    %v609 = vpop.permute.xlu0 %608
    %v610 = vsel %vm44, %v607, 0
    %v612 = vsel %vm44, %v609, 0
    %614 = vmatpush.msra.mxu0 0.0
    %615 = vmatpush.msra.mxu0 0.0
    %616 = vmatpush.msra.mxu0 0.0
    %617 = vmatpush.msra.mxu0 0.0
    %618 = vmatpush.msra.mxu0 0.0
    %619 = vmatpush.msra.mxu0 0.0
    %620 = vmatpush.msra.mxu0 0.0
    %621 = vmatpush.msra.mxu0 0.0
    %622 = vmatpush.msra.mxu0 0.0
    %623 = vmatpush.msra.mxu0 0.0
    %624 = vmatpush.msra.mxu0 0.0
    %625 = vmatpush.msra.mxu0 0.0
    %626 = vmatpush.msra.mxu0 0.0
    %627 = vmatpush.msra.mxu0 0.0
    %628 = vmatpush.msra.mxu0 0.0
    %629 = vmatpush.msra.mxu0 %v605
    %630 = vmatmul.f32.gmra.mxu0 %v610
    %v631 = vpop.f32.mrf.mxu0
    %v632 = vadd.f32 0.0, %v631
    %633 = vmatmul.f32.gmra.mxu0 %v612
    %v634 = vpop.f32.mrf.mxu0
    %v635 = vadd.f32 0.0, %v634
    %636 = vdwg.mxu0
    %v637 = vmul.f32 %v632, 0.35355338
    %v638 = vmul.f32 %v635, 0.35355338
    %v639 = vsel %vm76, %v637, -inf
    %640 = vmax.xlane.f32.xlu0 %v639
    %v641 = vpop.xlane.xlu0 %640
    %v642 = vsel %vm76, %v638, -inf
    %643 = vmax.xlane.f32.xlu0 %v642
    %v644 = vpop.xlane.xlu0 %643
    %v645 = vsub.f32 %v637, %v641
    %v646 = vsub.f32 %v638, %v644
    %v647 = vmul.f32 %v645, 1.442695
    %v648 = vpow.pop %v647
    %v649 = vmul.f32 %v646, 1.442695
    %v650 = vpow.pop %v649
    %v651 = vsel %vm76, %v648, 0.0
    %652 = vadd.xlane.f32.xlu0 %v651
    %v653 = vpop.xlane.xlu0 %652
    %v654 = vsel %vm76, %v650, 0.0
    %655 = vadd.xlane.f32.xlu0 %v654
    %v656 = vpop.xlane.xlu0 %655
    %v657 = vrcp.pop %v653
    %v658 = vrcp.pop %v656
    %659 = vrot.lane.b32.xlu0 %v42, 104
    %v660 = vpop.permute.xlu0 %659
    %661 = vrot.lane.b32.xlu0 %v43, 104
    %v662 = vpop.permute.xlu0 %661
    %v666 = vsel %vm76, %v648, 0
    %v669 = vsel %vm76, %v650, 0
    %671 = vmatpush.msra.mxu0 0.0
    %672 = vmatpush.msra.mxu0 0.0
    %673 = vmatpush.msra.mxu0 0.0
    %674 = vmatpush.msra.mxu0 0.0
    %675 = vmatpush.msra.mxu0 0.0
    %676 = vmatpush.msra.mxu0 0.0
    %677 = vmatpush.msra.mxu0 0.0
    %678 = vmatpush.msra.mxu0 0.0
    %679 = vmatpush.msra.mxu0 0.0
    %680 = vmatpush.msra.mxu0 0.0
    %681 = vmatpush.msra.mxu0 0.0
    %682 = vmatpush.msra.mxu0 0.0
    %683 = vmatpush.msra.mxu0 0.0
    %684 = vmatpush.msra.mxu0 0.0
    %685 = vmatpush.msra.mxu0 %v662
    %686 = vmatpush.msra.mxu0 %v660
    %687 = vmatmul.f32.gmra.mxu0 %v666
    %v688 = vpop.f32.mrf.mxu0
    %v689 = vadd.f32 0.0, %v688
    %690 = vmatmul.f32.gmra.mxu0 %v669
    %v691 = vpop.f32.mrf.mxu0
    %v692 = vadd.f32 0.0, %v691
    %693 = vdwg.mxu0
    %v694 = vmul.f32 %v689, %v657
    %v695 = vmul.f32 %v692, %v658
    %v696 = vld [vmem:[%s2 + $0x38] sm:$0xff]
    %697 = vrot.lane.b32.xlu0 %v39, 72
    %v698 = vpop.permute.xlu0 %697
    %699 = vrot.lane.b32.xlu0 %v40, 72
    %v700 = vpop.permute.xlu0 %699
    %v701 = vsel %vm44, %v698, 0
    %v703 = vsel %vm44, %v700, 0
    %705 = vmatpush.msra.mxu0 0.0
    %706 = vmatpush.msra.mxu0 0.0
    %707 = vmatpush.msra.mxu0 0.0
    %708 = vmatpush.msra.mxu0 0.0
    %709 = vmatpush.msra.mxu0 0.0
    %710 = vmatpush.msra.mxu0 0.0
    %711 = vmatpush.msra.mxu0 0.0
    %712 = vmatpush.msra.mxu0 0.0
    %713 = vmatpush.msra.mxu0 0.0
    %714 = vmatpush.msra.mxu0 0.0
    %715 = vmatpush.msra.mxu0 0.0
    %716 = vmatpush.msra.mxu0 0.0
    %717 = vmatpush.msra.mxu0 0.0
    %718 = vmatpush.msra.mxu0 0.0
    %719 = vmatpush.msra.mxu0 0.0
    %720 = vmatpush.msra.mxu0 %v696
    %721 = vmatmul.f32.gmra.mxu0 %v701
    %v722 = vpop.f32.mrf.mxu0
    %v723 = vadd.f32 0.0, %v722
    %724 = vmatmul.f32.gmra.mxu0 %v703
    %v725 = vpop.f32.mrf.mxu0
    %v726 = vadd.f32 0.0, %v725
    %727 = vdwg.mxu0
    %v728 = vmul.f32 %v723, 0.35355338
    %v729 = vmul.f32 %v726, 0.35355338
    %v730 = vsel %vm76, %v728, -inf
    %731 = vmax.xlane.f32.xlu0 %v730
    %v732 = vpop.xlane.xlu0 %731
    %v733 = vsel %vm76, %v729, -inf
    %734 = vmax.xlane.f32.xlu0 %v733
    %v735 = vpop.xlane.xlu0 %734
    %v736 = vsub.f32 %v728, %v732
    %v737 = vsub.f32 %v729, %v735
    %v738 = vmul.f32 %v736, 1.442695
    %v739 = vpow.pop %v738
    %v740 = vmul.f32 %v737, 1.442695
    %v741 = vpow.pop %v740
    %v742 = vsel %vm76, %v739, 0.0
    %743 = vadd.xlane.f32.xlu0 %v742
    %v744 = vpop.xlane.xlu0 %743
    %v745 = vsel %vm76, %v741, 0.0
    %746 = vadd.xlane.f32.xlu0 %v745
    %v747 = vpop.xlane.xlu0 %746
    %v748 = vrcp.pop %v744
    %v749 = vrcp.pop %v747
    %750 = vrot.lane.b32.xlu0 %v42, 72
    %v751 = vpop.permute.xlu0 %750
    %752 = vrot.lane.b32.xlu0 %v43, 72
    %v753 = vpop.permute.xlu0 %752
    %v757 = vsel %vm76, %v739, 0
    %v760 = vsel %vm76, %v741, 0
    %762 = vmatpush.msra.mxu0 0.0
    %763 = vmatpush.msra.mxu0 0.0
    %764 = vmatpush.msra.mxu0 0.0
    %765 = vmatpush.msra.mxu0 0.0
    %766 = vmatpush.msra.mxu0 0.0
    %767 = vmatpush.msra.mxu0 0.0
    %768 = vmatpush.msra.mxu0 0.0
    %769 = vmatpush.msra.mxu0 0.0
    %770 = vmatpush.msra.mxu0 0.0
    %771 = vmatpush.msra.mxu0 0.0
    %772 = vmatpush.msra.mxu0 0.0
    %773 = vmatpush.msra.mxu0 0.0
    %774 = vmatpush.msra.mxu0 0.0
    %775 = vmatpush.msra.mxu0 0.0
    %776 = vmatpush.msra.mxu0 %v753
    %777 = vmatpush.msra.mxu0 %v751
    %778 = vmatmul.f32.gmra.mxu0 %v757
    %v779 = vpop.f32.mrf.mxu0
    %v780 = vadd.f32 0.0, %v779
    %781 = vmatmul.f32.gmra.mxu0 %v760
    %v782 = vpop.f32.mrf.mxu0
    %v783 = vadd.f32 0.0, %v782
    %784 = vdwg.mxu0
    %v785 = vmul.f32 %v780, %v748
    %v786 = vmul.f32 %v783, %v749
    %v787 = vmul.f32 %v221, %v694
    %v788 = vmul.f32 %v221, %v695
    %v789 = vmul.f32 %v224, %v785
    %v790 = vmul.f32 %v224, %v786
    %v791 = vadd.f32 %v787, %v789
    %v792 = vadd.f32 %v788, %v790
    %795 = vrot.lane.b32.xlu0 %v415, 8
    %v796 = vpop.permute.xlu0 %795
    %797 = vrot.lane.b32.xlu0 %v416, 8
    %v798 = vpop.permute.xlu0 %797
    %803 = vrot.lane.b32.xlu0 %v603, 16
    %v804 = vpop.permute.xlu0 %803
    %805 = vrot.lane.b32.xlu0 %v604, 16
    %v806 = vpop.permute.xlu0 %805
    %811 = vrot.lane.b32.xlu0 %v791, 24
    %v812 = vpop.permute.xlu0 %811
    %813 = vrot.lane.b32.xlu0 %v792, 24
    %v814 = vpop.permute.xlu0 %813
    %v817 = vsel %vm44, %v227, %v796
    %v818 = vsel %vm44, %v228, %v798
    %v819 = vsel %vm76, %v817, %v804
    %v820 = vsel %vm76, %v818, %v806
    %vm821 = vcmask 195584
    %v822 = vsel %vm821, %v819, %v812
    %v823 = vsel %vm821, %v820, %v814
    %v824 = vld [vmem:[%s4] sm:$0xff]
    %v825 = vld [vmem:[%s4 + $0x8] sm:$0xff]
    %v826 = vld [vmem:[%s4 + $0x10] sm:$0xff]
    %v827 = vld [vmem:[%s4 + $0x18] sm:$0xff]
    %v828 = vld [vmem:[%s5] sm:$0x1]
    %v830 = vperm.slane %v828, 0
    %vm832 = vcmask 261120
    %v834 = vsel %vm832, %v822, 0
    %v837 = vsel %vm832, %v823, 0
    %839 = vmatpush.msra.mxu0 0.0
    %840 = vmatpush.msra.mxu0 0.0
    %841 = vmatpush.msra.mxu0 0.0
    %842 = vmatpush.msra.mxu0 0.0
    %843 = vmatpush.msra.mxu0 0.0
    %844 = vmatpush.msra.mxu0 0.0
    %845 = vmatpush.msra.mxu0 0.0
    %846 = vmatpush.msra.mxu0 0.0
    %847 = vmatpush.msra.mxu0 0.0
    %848 = vmatpush.msra.mxu0 0.0
    %849 = vmatpush.msra.mxu0 0.0
    %850 = vmatpush.msra.mxu0 0.0
    %851 = vmatpush.msra.mxu0 %v827
    %852 = vmatpush.msra.mxu0 %v826
    %853 = vmatpush.msra.mxu0 %v825
    %854 = vmatpush.msra.mxu0 %v824
    %855 = vmatmul.f32.gmra.mxu0 %v834
    %v856 = vpop.f32.mrf.mxu0
    %v857 = vadd.f32 %v830, %v856
    %858 = vmatmul.f32.gmra.mxu0 %v837
    %v859 = vpop.f32.mrf.mxu0
    %v860 = vadd.f32 %v830, %v859
    %861 = vdwg.mxu0
    %vm862 = vcmask 523264
    %863 = vst.msk [vmem:[#allocation5] sm:$0xff] %vm862, %v857
    %864 = vst.msk [vmem:[#allocation5 + $0x8] sm:$0xff] %vm862, %v860
    // Predicated region
    $region30: #{reprogramming_layer_forward.7} parent=1 // pred_check
      _
    $region31: #{reprogramming_layer_forward.7} parent=1 // pred_check_branch
      %866 = sbr.rel (0) target = $region33
    $region32: #{reprogramming_layer_forward.7} parent=1 // pred_region
      %868 = vsyncadd [#allocation3], 0
      %s869 = sshll.u32 [#allocation5], 4
      %s870 = int_to_ptr.vmem [resolvable:$true] %s869
      %s871 = sshll.u32 %s6, 4
      %s872 = int_to_ptr.hbm [resolvable:$true] %s871
      %877 = dma.vmem_to_hbm [thread:$0]  %s870, 256, %s872, [#allocation3], 128, 128, 8
    $region33: #{reprogramming_layer_forward.7} parent=1 // pred_fallthru
      _
    // Predicated region
    $region34: #{reprogramming_layer_forward.7} parent=1 // pred_check
      _
    $region35: #{reprogramming_layer_forward.7} parent=1 // pred_check_branch
      %879 = sbr.rel (0) target = $region37
    $region36: #{reprogramming_layer_forward.7} parent=1 // pred_region
      %881 = dma.done [#allocation3], 256
    $region37: #{reprogramming_layer_forward.7} parent=1 // pred_fallthru
      _
    %882 = vsyncpa [#allocation3], 1
    %883 = vsyncpa [#allocation4], 1

</llo_original>
